<compile_context>
chip_gen: v5e
topology: v5e:2x2
jax: 0.10.0
libtpu: 0.0.40
codegen_flags: <defaults>
</compile_context>

<pallas_src>
import jax
import jax.numpy as jnp
from jax.experimental import pallas as pl
from jax.experimental.pallas import tpu as pltpu

_BN_EPS = 1e-5
_LANE = 128


def _round_up(x, m):
    return (x + m - 1) // m * m


# ------------------------------ MaxPool2d(2) -------------------------------- #

def maxpool2x2_nhwc(x):
    """2x2 / stride-2 max pool on an NHWC tensor (Pallas kernel, grid over N)."""
    N, H0, W0, C = x.shape
    assert H0 % 2 == 0 and W0 % 2 == 0
    Ho, Wo = H0 // 2, W0 // 2
    xr = x.reshape(N, Ho, 2, Wo, 2 * C)  # free reshape (contiguous regroup)

    def kernel(x_ref, o_ref):
        v = x_ref[0]                                       # (Ho, 2, Wo, 2C)
        m = jnp.maximum(v[:, 0], v[:, 1])                  # rows 2h / 2h+1
        o_ref[0] = jnp.maximum(m[:, :, :C], m[:, :, C:])   # cols 2w / 2w+1

    return pl.pallas_call(
        kernel,
        out_shape=jax.ShapeDtypeStruct((N, Ho, Wo, C), x.dtype),
        grid=(N,),
        in_specs=[pl.BlockSpec((1, Ho, 2, Wo, 2 * C),
                               lambda n: (n, 0, 0, 0, 0))],
        out_specs=pl.BlockSpec((1, Ho, Wo, C), lambda n: (n, 0, 0, 0)),
        compiler_params=pltpu.CompilerParams(
            dimension_semantics=("parallel",)),
    )(xr)


# ------------------------ Conv3x3 + BatchNorm + ReLU ------------------------ #

def conv_bn_relu_layer(xflat, w, gamma, beta, H, W):
    """One Conv2d(3x3, pad=1) + BatchNorm2d(batch stats, biased var) + ReLU.

    xflat: (N, L, Cin_p) spatially padded, row-flattened NHWC activation
           (value of pixel (h, w) sits at flat index (h+1)*Wp + (w+1); borders
           and the alignment tail are zero).
    Returns the next layer's input in the same layout: (N, L, Cout_p).
    """
    N, L, Cin_p = xflat.shape
    Cout, Cin_real, KH, KW = w.shape
    assert KH == 3 and KW == 3, "DownBlock uses 3x3 convs with padding=1"
    assert Cin_real <= Cin_p
    Hp, Wp = H + 2, W + 2
    HWp = H * Wp
    Lout = _round_up(Hp * Wp + 2, 8)
    assert L >= Hp * Wp + 2
    Cout_p = _round_up(Cout, _LANE)

    # Weights -> (3, 3, Cin_p, Cout_p), zero padded on both channel dims.
    wk = jnp.transpose(w, (2, 3, 1, 0))
    wk = jnp.pad(wk, ((0, 0), (0, 0),
                      (0, Cin_p - Cin_real), (0, Cout_p - Cout)))
    gamma_p = jnp.pad(gamma, (0, Cout_p - Cout))
    beta_p = jnp.pad(beta, (0, Cout_p - Cout))

    # --- pass 1: conv via 9 shifted MXU dots + per-image BN partial sums --- #
    def conv_stats_kernel(x_ref, w_ref, y_ref, s_ref, q_ref):
        acc = jnp.zeros((HWp, Cout_p), jnp.float32)
        for kh in range(3):
            for kw in range(3):
                s = kh * Wp + kw
                p = x_ref[0, s:s + HWp, :]               # (HWp, Cin_p)
                acc = acc + jnp.dot(p, w_ref[kh, kw],
                                    preferred_element_type=jnp.float32)
        row = jax.lax.broadcasted_iota(jnp.int32, (HWp, 1), 0)
        valid = (row % Wp) < W                           # drop the 2 wrap cols
        masked = jnp.where(valid, acc, 0.0)
        y_ref[0] = acc
        s_ref[...] = jnp.sum(masked, axis=0)[None, None, :]
        q_ref[...] = jnp.sum(masked * masked, axis=0)[None, None, :]

    y_pre, sums, sqs = pl.pallas_call(
        conv_stats_kernel,
        out_shape=(jax.ShapeDtypeStruct((N, HWp, Cout_p), jnp.float32),
                   jax.ShapeDtypeStruct((N, 1, Cout_p), jnp.float32),
                   jax.ShapeDtypeStruct((N, 1, Cout_p), jnp.float32)),
        grid=(N,),
        in_specs=[pl.BlockSpec((1, L, Cin_p), lambda n: (n, 0, 0)),
                  pl.BlockSpec((3, 3, Cin_p, Cout_p),
                               lambda n: (0, 0, 0, 0))],
        out_specs=(pl.BlockSpec((1, HWp, Cout_p), lambda n: (n, 0, 0)),
                   pl.BlockSpec((1, 1, Cout_p), lambda n: (n, 0, 0)),
                   pl.BlockSpec((1, 1, Cout_p), lambda n: (n, 0, 0))),
        compiler_params=pltpu.CompilerParams(
            dimension_semantics=("parallel",)),
    )(xflat, wk)

    # --- tiny global BN reduction (N x Cout_p) + scale/shift in plain JAX --- #
    count = jnp.float32(N * H * W)
    mean = jnp.sum(sums[:, 0, :], axis=0) / count
    var = jnp.sum(sqs[:, 0, :], axis=0) / count - mean * mean    # biased var
    inv = jax.lax.rsqrt(var + _BN_EPS)
    scale = (gamma_p * inv).reshape(1, Cout_p)
    shift = (beta_p - mean * gamma_p * inv).reshape(1, Cout_p)

    # --- pass 2: y*scale + shift, ReLU, emit next layer's padded input ------ #
    def bn_relu_pad_kernel(y_ref, sc_ref, sh_ref, o_ref):
        y = y_ref[0]                                     # (HWp, Cout_p)
        row = jax.lax.broadcasted_iota(jnp.int32, (HWp, 1), 0)
        valid = (row % Wp) < W
        z = jnp.maximum(y * sc_ref[...] + sh_ref[...], 0.0)
        z = jnp.where(valid, z, 0.0)
        o_ref[...] = jnp.zeros((1, Lout, Cout_p), jnp.float32)
        o_ref[0, Wp + 1:Wp + 1 + HWp, :] = z             # interior at (h+1,w+1)

    out = pl.pallas_call(
        bn_relu_pad_kernel,
        out_shape=jax.ShapeDtypeStruct((N, Lout, Cout_p), jnp.float32),
        grid=(N,),
        in_specs=[pl.BlockSpec((1, HWp, Cout_p), lambda n: (n, 0, 0)),
                  pl.BlockSpec((1, Cout_p), lambda n: (0, 0)),
                  pl.BlockSpec((1, Cout_p), lambda n: (0, 0))],
        out_specs=pl.BlockSpec((1, Lout, Cout_p), lambda n: (n, 0, 0)),
        compiler_params=pltpu.CompilerParams(
            dimension_semantics=("parallel",)),
    )(y_pre, scale, shift)
    return out


# ------------------------------ DownBlock ----------------------------------- #

def make_downblock_params(key, in_channel, out_channel, middle_channels=(),
                          kernel_size=3):
    """Replicates BaseConv.__init__'s channel-list logic.  The conv bias is
    omitted: it is exactly cancelled by the training-mode BatchNorm that
    follows (batch-mean subtraction removes any per-channel constant)."""
    middle_channels = list(middle_channels)
    if middle_channels:
        middle_channels.append(out_channel)
    list_channels = [in_channel] + middle_channels + [out_channel]
    params = []
    for in_c, out_c in zip(list_channels[:-1], list_channels[1:]):
        key, k_w, k_g, k_b = jax.random.split(key, 4)
        params.append({
            "w": 0.1 * jax.random.normal(
                k_w, (out_c, in_c, kernel_size, kernel_size), jnp.float32),
            "gamma": jax.random.uniform(k_g, (out_c,), jnp.float32, 0.5, 1.5),
            "beta": 0.1 * jax.random.normal(k_b, (out_c,), jnp.float32),
        })
    return params


@jax.jit
def downblock_forward(x, params):
    """DownBlock.forward: NCHW x -> MaxPool2d(2) -> [conv+BN+ReLU]* -> NCHW."""
    N, C, H0, W0 = x.shape
    x_nhwc = jnp.transpose(x, (0, 2, 3, 1))
    pooled = maxpool2x2_nhwc(x_nhwc)                      # (N, Ho, Wo, C)
    _, H, W, _ = pooled.shape
    Hp, Wp = H + 2, W + 2
    L = _round_up(Hp * Wp + 2, 8)

    # Spatially pad + row-flatten the pooled activation (layer-0 input layout).
    xp = jnp.pad(pooled, ((0, 0), (1, 1), (1, 1), (0, 0)))
    xflat = jnp.pad(xp.reshape(N, Hp * Wp, C),
                    ((0, 0), (0, L - Hp * Wp), (0, 0)))

    for layer in params:
        xflat = conv_bn_relu_layer(xflat, layer["w"], layer["gamma"],
                                   layer["beta"], H, W)

    cout = params[-1]["w"].shape[0]
    out = xflat[:, :Hp * Wp, :].reshape(N, Hp, Wp, -1)[:, 1:1 + H, 1:1 + W,
                                                       :cout]
    return jnp.transpose(out, (0, 3, 1, 2))


# ------------------------------ reference ----------------------------------- #

def _reference_downblock(x, params):
    N, C, H0, W0 = x.shape
    y = x.reshape(N, C, H0 // 2, 2, W0 // 2, 2).max(axis=(3, 5))
    for layer in params:
        out = jax.lax.conv_general_dilated(
            y, layer["w"], window_strides=(1, 1), padding="SAME",
            dimension_numbers=("NCHW", "OIHW", "NCHW"),
            precision=jax.lax.Precision.HIGHEST)
        mean = out.mean(axis=(0, 2, 3), keepdims=True)
        var = jnp.mean((out - mean) ** 2, axis=(0, 2, 3), keepdims=True)
        g = layer["gamma"].reshape(1, -1, 1, 1)
        b = layer["beta"].reshape(1, -1, 1, 1)
        y = jnp.maximum((out - mean) * jax.lax.rsqrt(var + _BN_EPS) * g + b,
                        0.0)
    return y


# --------------------------------- main -------------------------------------- #

if __name__ == "__main__":
    key = jax.random.PRNGKey(0)
    k_x, k_p = jax.random.split(key)

    N, Cin, H, W = 2, 4, 16, 16
    Cout = 8
    x = jax.random.normal(k_x, (N, Cin, H, W), dtype=jnp.float32)
    params = make_downblock_params(k_p, Cin, Cout, middle_channels=[],
                                   kernel_size=3)

    out = jax.block_until_ready(downblock_forward(x, params))

    assert out.shape == (N, Cout, H // 2, W // 2), out.shape
    assert bool(jnp.all(jnp.isfinite(out)))

    ref = _reference_downblock(x, params)
    max_err = float(jnp.max(jnp.abs(out - ref)))
    assert bool(jnp.allclose(out, ref, atol=2e-2, rtol=2e-2)), max_err

    print("KERNEL_OK")
</pallas_src>

<mosaic_0001>
module attributes {stable_mosaic.version = 11 : i64} {
  func.func @kernel(%arg0: i32, %arg1: memref<1x8x2x8x8xf32, #tpu.memory_space<vmem>>, %arg2: memref<1x8x8x4xf32, #tpu.memory_space<vmem>>) attributes {dimension_semantics = [#tpu.dimension_semantics<parallel>], iteration_bounds = array<i64: 2>, scalar_prefetch = 0 : i64, scratch_operands = 0 : i64, tpu.core_type = #tpu.core_type<tc>, window_params = [{transform_indices = @transform_0, window_bounds = array<i64: 1, 8, 2, 8, 8>}, {transform_indices = @transform_1, window_bounds = array<i64: 1, 8, 8, 4>}]} {
    %c0 = arith.constant 0 : index
    %c0_0 = arith.constant 0 : index
    %c0_1 = arith.constant 0 : index
    %c0_2 = arith.constant 0 : index
    %c0_3 = arith.constant 0 : index
    %0 = vector.load %arg1[%c0, %c0_0, %c0_1, %c0_2, %c0_3] : memref<1x8x2x8x8xf32, #tpu.memory_space<vmem>>, vector<1x8x2x8x8xf32>
    %1 = vector.shape_cast %0 : vector<1x8x2x8x8xf32> to vector<8x2x8x8xf32>
    %2 = vector.extract_strided_slice %1 {offsets = [0, 0, 0, 0], sizes = [8, 1, 8, 8], strides = [1, 1, 1, 1]} : vector<8x2x8x8xf32> to vector<8x1x8x8xf32>
    %3 = vector.shape_cast %2 : vector<8x1x8x8xf32> to vector<8x8x8xf32>
    %4 = vector.extract_strided_slice %1 {offsets = [0, 1, 0, 0], sizes = [8, 1, 8, 8], strides = [1, 1, 1, 1]} : vector<8x2x8x8xf32> to vector<8x1x8x8xf32>
    %5 = vector.shape_cast %4 : vector<8x1x8x8xf32> to vector<8x8x8xf32>
    %6 = arith.maximumf %3, %5 : vector<8x8x8xf32>
    %7 = vector.extract_strided_slice %6 {offsets = [0, 0, 0], sizes = [8, 8, 4], strides = [1, 1, 1]} : vector<8x8x8xf32> to vector<8x8x4xf32>
    %8 = vector.extract_strided_slice %6 {offsets = [0, 0, 4], sizes = [8, 8, 4], strides = [1, 1, 1]} : vector<8x8x8xf32> to vector<8x8x4xf32>
    %9 = arith.maximumf %7, %8 : vector<8x8x4xf32>
    %c0_4 = arith.constant 0 : index
    %c0_5 = arith.constant 0 : index
    %c0_6 = arith.constant 0 : index
    %c0_7 = arith.constant 0 : index
    %10 = vector.load %arg2[%c0_4, %c0_5, %c0_6, %c0_7] : memref<1x8x8x4xf32, #tpu.memory_space<vmem>>, vector<1x8x8x4xf32>
    %11 = vector.shape_cast %10 : vector<1x8x8x4xf32> to vector<8x8x4xf32>
    %12 = vector.shape_cast %9 : vector<8x8x4xf32> to vector<1x8x8x4xf32>
    tpu.vector_store %arg2[%c0_4, %c0_5, %c0_6, %c0_7], %12 {strides = array<i32>} : memref<1x8x8x4xf32, #tpu.memory_space<vmem>>, vector<1x8x8x4xf32>,
    return
  }
  func.func @transform_0(%arg0: i32) -> (i32, i32, i32, i32, i32) {
    %c0_i32 = arith.constant 0 : i32
    %c0_i32_0 = arith.constant 0 : i32
    %c0_i32_1 = arith.constant 0 : i32
    %c0_i32_2 = arith.constant 0 : i32
    %c0_i32_3 = arith.constant 0 : i32
    return %arg0, %c0_i32, %c0_i32_0, %c0_i32_1, %c0_i32_2 : i32, i32, i32, i32, i32
  }
  func.func @transform_1(%arg0: i32) -> (i32, i32, i32, i32) {
    %c0_i32 = arith.constant 0 : i32
    %c0_i32_0 = arith.constant 0 : i32
    %c0_i32_1 = arith.constant 0 : i32
    %c0_i32_2 = arith.constant 0 : i32
    return %arg0, %c0_i32, %c0_i32_0, %c0_i32_1 : i32, i32, i32, i32
  }
}

module attributes {stable_mosaic.version = 11 : i64} {
  func.func @bn_relu_pad_kernel(%arg0: i32, %arg1: memref<1x80x128xf32, #tpu.memory_space<vmem>>, %arg2: memref<1x128xf32, #tpu.memory_space<vmem>>, %arg3: memref<1x128xf32, #tpu.memory_space<vmem>>, %arg4: memref<1x104x128xf32, #tpu.memory_space<vmem>>) attributes {dimension_semantics = [#tpu.dimension_semantics<parallel>], iteration_bounds = array<i64: 2>, scalar_prefetch = 0 : i64, scratch_operands = 0 : i64, tpu.core_type = #tpu.core_type<tc>, window_params = [{transform_indices = @transform_0, window_bounds = array<i64: 1, 80, 128>}, {pipeline_mode = #tpu.pipeline_mode<synchronous>, transform_indices = @transform_1, window_bounds = array<i64: 1, 128>}, {pipeline_mode = #tpu.pipeline_mode<synchronous>, transform_indices = @transform_2, window_bounds = array<i64: 1, 128>}, {transform_indices = @transform_3, window_bounds = array<i64: 1, 104, 128>}]} {
    %c0 = arith.constant 0 : index
    %c0_0 = arith.constant 0 : index
    %c0_1 = arith.constant 0 : index
    %0 = vector.load %arg1[%c0, %c0_0, %c0_1] : memref<1x80x128xf32, #tpu.memory_space<vmem>>, vector<1x80x128xf32>
    %1 = vector.shape_cast %0 : vector<1x80x128xf32> to vector<80x128xf32>
    %2 = tpu.iota {dimensions = array<i32: 0>} : vector<80x1xi32>
    %c10_i32 = arith.constant 10 : i32
    %c0_i32 = arith.constant 0 : i32
    %3 = arith.cmpi eq, %c10_i32, %c0_i32 : i32
    %c1_i32 = arith.constant 1 : i32
    %4 = arith.select %3, %c1_i32, %c10_i32 : i32
    %5 = vector.broadcast %4 : i32 to vector<80x1xi32>
    %6 = arith.remsi %2, %5 : vector<80x1xi32>
    %c0_i32_2 = arith.constant 0 : i32
    %7 = vector.broadcast %c0_i32_2 : i32 to vector<80x1xi32>
    %8 = arith.cmpi ne, %6, %7 : vector<80x1xi32>
    %c0_i32_3 = arith.constant 0 : i32
    %9 = vector.broadcast %c0_i32_3 : i32 to vector<80x1xi32>
    %10 = arith.cmpi slt, %6, %9 : vector<80x1xi32>
    %c0_i32_4 = arith.constant 0 : i32
    %11 = arith.cmpi slt, %4, %c0_i32_4 : i32
    %12 = vector.broadcast %11 : i1 to vector<80x1xi1>
    %13 = vector.broadcast %12 : vector<80x1xi1> to vector<80x1xi1>
    %14 = arith.xori %10, %13 : vector<80x1xi1>
    %15 = arith.andi %14, %8 : vector<80x1xi1>
    %16 = vector.broadcast %4 : i32 to vector<80x1xi32>
    %17 = arith.addi %6, %16 : vector<80x1xi32>
    %18 = arith.select %15, %17, %6 : vector<80x1xi1>, vector<80x1xi32>
    %c8_i32 = arith.constant 8 : i32
    %19 = vector.broadcast %c8_i32 : i32 to vector<80x1xi32>
    %20 = arith.cmpi slt, %18, %19 : vector<80x1xi32>
    %c0_5 = arith.constant 0 : index
    %c0_6 = arith.constant 0 : index
    %21 = vector.load %arg2[%c0_5, %c0_6] : memref<1x128xf32, #tpu.memory_space<vmem>>, vector<1x128xf32>
    %22 = vector.broadcast %21 : vector<1x128xf32> to vector<80x128xf32>
    %23 = arith.mulf %1, %22 : vector<80x128xf32>
    %c0_7 = arith.constant 0 : index
    %c0_8 = arith.constant 0 : index
    %24 = vector.load %arg3[%c0_7, %c0_8] : memref<1x128xf32, #tpu.memory_space<vmem>>, vector<1x128xf32>
    %25 = vector.broadcast %24 : vector<1x128xf32> to vector<80x128xf32>
    %26 = arith.addf %23, %25 : vector<80x128xf32>
    %cst = arith.constant 0.000000e+00 : f32
    %27 = vector.broadcast %cst : f32 to vector<80x128xf32>
    %28 = arith.maximumf %26, %27 : vector<80x128xf32>
    %cst_9 = arith.constant 0.000000e+00 : f32
    %29 = vector.shape_cast %20 : vector<80x1xi1> to vector<80x1xi1>
    %30 = vector.broadcast %29 : vector<80x1xi1> to vector<80x128xi1>
    %31 = vector.broadcast %cst_9 : f32 to vector<80x128xf32>
    %32 = arith.select %30, %28, %31 : vector<80x128xi1>, vector<80x128xf32>
    %cst_10 = arith.constant 0.000000e+00 : f32
    %33 = vector.broadcast %cst_10 : f32 to vector<1x104x128xf32>
    %c0_11 = arith.constant 0 : index
    %c0_12 = arith.constant 0 : index
    %c0_13 = arith.constant 0 : index
    %34 = vector.load %arg4[%c0_11, %c0_12, %c0_13] : memref<1x104x128xf32, #tpu.memory_space<vmem>>, vector<1x104x128xf32>
    tpu.vector_store %arg4[%c0_11, %c0_12, %c0_13], %33 {strides = array<i32>} : memref<1x104x128xf32, #tpu.memory_space<vmem>>, vector<1x104x128xf32>,
    %c0_14 = arith.constant 0 : index
    %c11 = arith.constant 11 : index
    %c0_15 = arith.constant 0 : index
    %35 = vector.load %arg4[%c0_14, %c11, %c0_15] : memref<1x104x128xf32, #tpu.memory_space<vmem>>, vector<1x80x128xf32>
    %36 = vector.shape_cast %35 : vector<1x80x128xf32> to vector<80x128xf32>
    %37 = vector.shape_cast %32 : vector<80x128xf32> to vector<1x80x128xf32>
    tpu.vector_store %arg4[%c0_14, %c11, %c0_15], %37 {strides = array<i32>} : memref<1x104x128xf32, #tpu.memory_space<vmem>>, vector<1x80x128xf32>,
    return
  }
  func.func @transform_0(%arg0: i32) -> (i32, i32, i32) {
    %c0_i32 = arith.constant 0 : i32
    %c0_i32_0 = arith.constant 0 : i32
    %c0_i32_1 = arith.constant 0 : i32
    return %arg0, %c0_i32, %c0_i32_0 : i32, i32, i32
  }
  func.func @transform_1(%arg0: i32) -> (i32, i32) {
    %c0_i32 = arith.constant 0 : i32
    %c0_i32_0 = arith.constant 0 : i32
    %c0_i32_1 = arith.constant 0 : i32
    return %c0_i32, %c0_i32_0 : i32, i32
  }
  func.func @transform_2(%arg0: i32) -> (i32, i32) {
    %c0_i32 = arith.constant 0 : i32
    %c0_i32_0 = arith.constant 0 : i32
    %c0_i32_1 = arith.constant 0 : i32
    return %c0_i32, %c0_i32_0 : i32, i32
  }
  func.func @transform_3(%arg0: i32) -> (i32, i32, i32) {
    %c0_i32 = arith.constant 0 : i32
    %c0_i32_0 = arith.constant 0 : i32
    %c0_i32_1 = arith.constant 0 : i32
    return %arg0, %c0_i32, %c0_i32_0 : i32, i32, i32
  }
}

module attributes {stable_mosaic.version = 11 : i64} {
  func.func @conv_stats_kernel(%arg0: i32, %arg1: memref<1x104x4xf32, #tpu.memory_space<vmem>>, %arg2: memref<3x3x4x128xf32, #tpu.memory_space<vmem>>, %arg3: memref<1x80x128xf32, #tpu.memory_space<vmem>>, %arg4: memref<1x1x128xf32, #tpu.memory_space<vmem>>, %arg5: memref<1x1x128xf32, #tpu.memory_space<vmem>>) attributes {dimension_semantics = [#tpu.dimension_semantics<parallel>], iteration_bounds = array<i64: 2>, scalar_prefetch = 0 : i64, scratch_operands = 0 : i64, tpu.core_type = #tpu.core_type<tc>, window_params = [{transform_indices = @transform_0, window_bounds = array<i64: 1, 104, 4>}, {pipeline_mode = #tpu.pipeline_mode<synchronous>, transform_indices = @transform_1, window_bounds = array<i64: 3, 3, 4, 128>}, {transform_indices = @transform_2, window_bounds = array<i64: 1, 80, 128>}, {transform_indices = @transform_3, window_bounds = array<i64: 1, 1, 128>}, {transform_indices = @transform_4, window_bounds = array<i64: 1, 1, 128>}]} {
    %cst = arith.constant 0.000000e+00 : f32
    %0 = vector.broadcast %cst : f32 to vector<80x128xf32>
    %c0 = arith.constant 0 : index
    %c0_0 = arith.constant 0 : index
    %c0_1 = arith.constant 0 : index
    %1 = vector.load %arg1[%c0, %c0_0, %c0_1] : memref<1x104x4xf32, #tpu.memory_space<vmem>>, vector<1x80x4xf32>
    %2 = vector.shape_cast %1 : vector<1x80x4xf32> to vector<80x4xf32>
    %c0_2 = arith.constant 0 : index
    %c0_3 = arith.constant 0 : index
    %c0_4 = arith.constant 0 : index
    %c0_5 = arith.constant 0 : index
    %3 = vector.load %arg2[%c0_2, %c0_3, %c0_4, %c0_5] : memref<3x3x4x128xf32, #tpu.memory_space<vmem>>, vector<1x1x4x128xf32>
    %4 = vector.shape_cast %3 : vector<1x1x4x128xf32> to vector<4x128xf32>
    %cst_6 = arith.constant dense<0.000000e+00> : vector<80x128xf32>
    %5 = tpu.matmul %2, %4, %cst_6 {dimension_numbers = #tpu.dot_dimension_numbers<[1], [0], [0], [1], [0, 0, 1, 1], [], []>} : vector<80x4xf32>, vector<4x128xf32>, vector<80x128xf32> -> vector<80x128xf32>
    %6 = arith.addf %0, %5 : vector<80x128xf32>
    %c0_7 = arith.constant 0 : index
    %c1 = arith.constant 1 : index
    %c0_8 = arith.constant 0 : index
    %7 = vector.load %arg1[%c0_7, %c1, %c0_8] : memref<1x104x4xf32, #tpu.memory_space<vmem>>, vector<1x80x4xf32>
    %8 = vector.shape_cast %7 : vector<1x80x4xf32> to vector<80x4xf32>
    %c0_9 = arith.constant 0 : index
    %c1_10 = arith.constant 1 : index
    %c0_11 = arith.constant 0 : index
    %c0_12 = arith.constant 0 : index
    %9 = vector.load %arg2[%c0_9, %c1_10, %c0_11, %c0_12] : memref<3x3x4x128xf32, #tpu.memory_space<vmem>>, vector<1x1x4x128xf32>
    %10 = vector.shape_cast %9 : vector<1x1x4x128xf32> to vector<4x128xf32>
    %cst_13 = arith.constant dense<0.000000e+00> : vector<80x128xf32>
    %11 = tpu.matmul %8, %10, %cst_13 {dimension_numbers = #tpu.dot_dimension_numbers<[1], [0], [0], [1], [0, 0, 1, 1], [], []>} : vector<80x4xf32>, vector<4x128xf32>, vector<80x128xf32> -> vector<80x128xf32>
    %12 = arith.addf %6, %11 : vector<80x128xf32>
    %c0_14 = arith.constant 0 : index
    %c2 = arith.constant 2 : index
    %c0_15 = arith.constant 0 : index
    %13 = vector.load %arg1[%c0_14, %c2, %c0_15] : memref<1x104x4xf32, #tpu.memory_space<vmem>>, vector<1x80x4xf32>
    %14 = vector.shape_cast %13 : vector<1x80x4xf32> to vector<80x4xf32>
    %c0_16 = arith.constant 0 : index
    %c2_17 = arith.constant 2 : index
    %c0_18 = arith.constant 0 : index
    %c0_19 = arith.constant 0 : index
    %15 = vector.load %arg2[%c0_16, %c2_17, %c0_18, %c0_19] : memref<3x3x4x128xf32, #tpu.memory_space<vmem>>, vector<1x1x4x128xf32>
    %16 = vector.shape_cast %15 : vector<1x1x4x128xf32> to vector<4x128xf32>
    %cst_20 = arith.constant dense<0.000000e+00> : vector<80x128xf32>
    %17 = tpu.matmul %14, %16, %cst_20 {dimension_numbers = #tpu.dot_dimension_numbers<[1], [0], [0], [1], [0, 0, 1, 1], [], []>} : vector<80x4xf32>, vector<4x128xf32>, vector<80x128xf32> -> vector<80x128xf32>
    %18 = arith.addf %12, %17 : vector<80x128xf32>
    %c0_21 = arith.constant 0 : index
    %c10 = arith.constant 10 : index
    %c0_22 = arith.constant 0 : index
    %19 = vector.load %arg1[%c0_21, %c10, %c0_22] : memref<1x104x4xf32, #tpu.memory_space<vmem>>, vector<1x80x4xf32>
    %20 = vector.shape_cast %19 : vector<1x80x4xf32> to vector<80x4xf32>
    %c1_23 = arith.constant 1 : index
    %c0_24 = arith.constant 0 : index
    %c0_25 = arith.constant 0 : index
    %c0_26 = arith.constant 0 : index
    %21 = vector.load %arg2[%c1_23, %c0_24, %c0_25, %c0_26] : memref<3x3x4x128xf32, #tpu.memory_space<vmem>>, vector<1x1x4x128xf32>
    %22 = vector.shape_cast %21 : vector<1x1x4x128xf32> to vector<4x128xf32>
    %cst_27 = arith.constant dense<0.000000e+00> : vector<80x128xf32>
    %23 = tpu.matmul %20, %22, %cst_27 {dimension_numbers = #tpu.dot_dimension_numbers<[1], [0], [0], [1], [0, 0, 1, 1], [], []>} : vector<80x4xf32>, vector<4x128xf32>, vector<80x128xf32> -> vector<80x128xf32>
    %24 = arith.addf %18, %23 : vector<80x128xf32>
    %c0_28 = arith.constant 0 : index
    %c11 = arith.constant 11 : index
    %c0_29 = arith.constant 0 : index
    %25 = vector.load %arg1[%c0_28, %c11, %c0_29] : memref<1x104x4xf32, #tpu.memory_space<vmem>>, vector<1x80x4xf32>
    %26 = vector.shape_cast %25 : vector<1x80x4xf32> to vector<80x4xf32>
    %c1_30 = arith.constant 1 : index
    %c1_31 = arith.constant 1 : index
    %c0_32 = arith.constant 0 : index
    %c0_33 = arith.constant 0 : index
    %27 = vector.load %arg2[%c1_30, %c1_31, %c0_32, %c0_33] : memref<3x3x4x128xf32, #tpu.memory_space<vmem>>, vector<1x1x4x128xf32>
    %28 = vector.shape_cast %27 : vector<1x1x4x128xf32> to vector<4x128xf32>
    %cst_34 = arith.constant dense<0.000000e+00> : vector<80x128xf32>
    %29 = tpu.matmul %26, %28, %cst_34 {dimension_numbers = #tpu.dot_dimension_numbers<[1], [0], [0], [1], [0, 0, 1, 1], [], []>} : vector<80x4xf32>, vector<4x128xf32>, vector<80x128xf32> -> vector<80x128xf32>
    %30 = arith.addf %24, %29 : vector<80x128xf32>
    %c0_35 = arith.constant 0 : index
    %c12 = arith.constant 12 : index
    %c0_36 = arith.constant 0 : index
    %31 = vector.load %arg1[%c0_35, %c12, %c0_36] : memref<1x104x4xf32, #tpu.memory_space<vmem>>, vector<1x80x4xf32>
    %32 = vector.shape_cast %31 : vector<1x80x4xf32> to vector<80x4xf32>
    %c1_37 = arith.constant 1 : index
    %c2_38 = arith.constant 2 : index
    %c0_39 = arith.constant 0 : index
    %c0_40 = arith.constant 0 : index
    %33 = vector.load %arg2[%c1_37, %c2_38, %c0_39, %c0_40] : memref<3x3x4x128xf32, #tpu.memory_space<vmem>>, vector<1x1x4x128xf32>
    %34 = vector.shape_cast %33 : vector<1x1x4x128xf32> to vector<4x128xf32>
    %cst_41 = arith.constant dense<0.000000e+00> : vector<80x128xf32>
    %35 = tpu.matmul %32, %34, %cst_41 {dimension_numbers = #tpu.dot_dimension_numbers<[1], [0], [0], [1], [0, 0, 1, 1], [], []>} : vector<80x4xf32>, vector<4x128xf32>, vector<80x128xf32> -> vector<80x128xf32>
    %36 = arith.addf %30, %35 : vector<80x128xf32>
    %c0_42 = arith.constant 0 : index
    %c20 = arith.constant 20 : index
    %c0_43 = arith.constant 0 : index
    %37 = vector.load %arg1[%c0_42, %c20, %c0_43] : memref<1x104x4xf32, #tpu.memory_space<vmem>>, vector<1x80x4xf32>
    %38 = vector.shape_cast %37 : vector<1x80x4xf32> to vector<80x4xf32>
    %c2_44 = arith.constant 2 : index
    %c0_45 = arith.constant 0 : index
    %c0_46 = arith.constant 0 : index
    %c0_47 = arith.constant 0 : index
    %39 = vector.load %arg2[%c2_44, %c0_45, %c0_46, %c0_47] : memref<3x3x4x128xf32, #tpu.memory_space<vmem>>, vector<1x1x4x128xf32>
    %40 = vector.shape_cast %39 : vector<1x1x4x128xf32> to vector<4x128xf32>
    %cst_48 = arith.constant dense<0.000000e+00> : vector<80x128xf32>
    %41 = tpu.matmul %38, %40, %cst_48 {dimension_numbers = #tpu.dot_dimension_numbers<[1], [0], [0], [1], [0, 0, 1, 1], [], []>} : vector<80x4xf32>, vector<4x128xf32>, vector<80x128xf32> -> vector<80x128xf32>
    %42 = arith.addf %36, %41 : vector<80x128xf32>
    %c0_49 = arith.constant 0 : index
    %c21 = arith.constant 21 : index
    %c0_50 = arith.constant 0 : index
    %43 = vector.load %arg1[%c0_49, %c21, %c0_50] : memref<1x104x4xf32, #tpu.memory_space<vmem>>, vector<1x80x4xf32>
    %44 = vector.shape_cast %43 : vector<1x80x4xf32> to vector<80x4xf32>
    %c2_51 = arith.constant 2 : index
    %c1_52 = arith.constant 1 : index
    %c0_53 = arith.constant 0 : index
    %c0_54 = arith.constant 0 : index
    %45 = vector.load %arg2[%c2_51, %c1_52, %c0_53, %c0_54] : memref<3x3x4x128xf32, #tpu.memory_space<vmem>>, vector<1x1x4x128xf32>
    %46 = vector.shape_cast %45 : vector<1x1x4x128xf32> to vector<4x128xf32>
    %cst_55 = arith.constant dense<0.000000e+00> : vector<80x128xf32>
    %47 = tpu.matmul %44, %46, %cst_55 {dimension_numbers = #tpu.dot_dimension_numbers<[1], [0], [0], [1], [0, 0, 1, 1], [], []>} : vector<80x4xf32>, vector<4x128xf32>, vector<80x128xf32> -> vector<80x128xf32>
    %48 = arith.addf %42, %47 : vector<80x128xf32>
    %c0_56 = arith.constant 0 : index
    %c22 = arith.constant 22 : index
    %c0_57 = arith.constant 0 : index
    %49 = vector.load %arg1[%c0_56, %c22, %c0_57] : memref<1x104x4xf32, #tpu.memory_space<vmem>>, vector<1x80x4xf32>
    %50 = vector.shape_cast %49 : vector<1x80x4xf32> to vector<80x4xf32>
    %c2_58 = arith.constant 2 : index
    %c2_59 = arith.constant 2 : index
    %c0_60 = arith.constant 0 : index
    %c0_61 = arith.constant 0 : index
    %51 = vector.load %arg2[%c2_58, %c2_59, %c0_60, %c0_61] : memref<3x3x4x128xf32, #tpu.memory_space<vmem>>, vector<1x1x4x128xf32>
    %52 = vector.shape_cast %51 : vector<1x1x4x128xf32> to vector<4x128xf32>
    %cst_62 = arith.constant dense<0.000000e+00> : vector<80x128xf32>
    %53 = tpu.matmul %50, %52, %cst_62 {dimension_numbers = #tpu.dot_dimension_numbers<[1], [0], [0], [1], [0, 0, 1, 1], [], []>} : vector<80x4xf32>, vector<4x128xf32>, vector<80x128xf32> -> vector<80x128xf32>
    %54 = arith.addf %48, %53 : vector<80x128xf32>
    %55 = tpu.iota {dimensions = array<i32: 0>} : vector<80x1xi32>
    %c10_i32 = arith.constant 10 : i32
    %c0_i32 = arith.constant 0 : i32
    %56 = arith.cmpi eq, %c10_i32, %c0_i32 : i32
    %c1_i32 = arith.constant 1 : i32
    %57 = arith.select %56, %c1_i32, %c10_i32 : i32
    %58 = vector.broadcast %57 : i32 to vector<80x1xi32>
    %59 = arith.remsi %55, %58 : vector<80x1xi32>
    %c0_i32_63 = arith.constant 0 : i32
    %60 = vector.broadcast %c0_i32_63 : i32 to vector<80x1xi32>
    %61 = arith.cmpi ne, %59, %60 : vector<80x1xi32>
    %c0_i32_64 = arith.constant 0 : i32
    %62 = vector.broadcast %c0_i32_64 : i32 to vector<80x1xi32>
    %63 = arith.cmpi slt, %59, %62 : vector<80x1xi32>
    %c0_i32_65 = arith.constant 0 : i32
    %64 = arith.cmpi slt, %57, %c0_i32_65 : i32
    %65 = vector.broadcast %64 : i1 to vector<80x1xi1>
    %66 = vector.broadcast %65 : vector<80x1xi1> to vector<80x1xi1>
    %67 = arith.xori %63, %66 : vector<80x1xi1>
    %68 = arith.andi %67, %61 : vector<80x1xi1>
    %69 = vector.broadcast %57 : i32 to vector<80x1xi32>
    %70 = arith.addi %59, %69 : vector<80x1xi32>
    %71 = arith.select %68, %70, %59 : vector<80x1xi1>, vector<80x1xi32>
    %c8_i32 = arith.constant 8 : i32
    %72 = vector.broadcast %c8_i32 : i32 to vector<80x1xi32>
    %73 = arith.cmpi slt, %71, %72 : vector<80x1xi32>
    %cst_66 = arith.constant 0.000000e+00 : f32
    %74 = vector.shape_cast %73 : vector<80x1xi1> to vector<80x1xi1>
    %75 = vector.broadcast %74 : vector<80x1xi1> to vector<80x128xi1>
    %76 = vector.broadcast %cst_66 : f32 to vector<80x128xf32>
    %77 = arith.select %75, %54, %76 : vector<80x128xi1>, vector<80x128xf32>
    %c0_67 = arith.constant 0 : index
    %c0_68 = arith.constant 0 : index
    %c0_69 = arith.constant 0 : index
    %78 = vector.load %arg3[%c0_67, %c0_68, %c0_69] : memref<1x80x128xf32, #tpu.memory_space<vmem>>, vector<1x80x128xf32>
    %79 = vector.shape_cast %78 : vector<1x80x128xf32> to vector<80x128xf32>
    %80 = vector.shape_cast %54 : vector<80x128xf32> to vector<1x80x128xf32>
    tpu.vector_store %arg3[%c0_67, %c0_68, %c0_69], %80 {strides = array<i32>} : memref<1x80x128xf32, #tpu.memory_space<vmem>>, vector<1x80x128xf32>,
    %cst_70 = arith.constant dense<0.000000e+00> : vector<128xf32>
    %81 = vector.multi_reduction <add>, %77, %cst_70 [0] : vector<80x128xf32> to vector<128xf32>
    %82 = vector.shape_cast %81 : vector<128xf32> to vector<1x1x128xf32>
    %c0_71 = arith.constant 0 : index
    %c0_72 = arith.constant 0 : index
    %c0_73 = arith.constant 0 : index
    %83 = vector.load %arg4[%c0_71, %c0_72, %c0_73] : memref<1x1x128xf32, #tpu.memory_space<vmem>>, vector<1x1x128xf32>
    tpu.vector_store %arg4[%c0_71, %c0_72, %c0_73], %82 {strides = array<i32>} : memref<1x1x128xf32, #tpu.memory_space<vmem>>, vector<1x1x128xf32>,
    %84 = arith.mulf %77, %77 : vector<80x128xf32>
    %cst_74 = arith.constant dense<0.000000e+00> : vector<128xf32>
    %85 = vector.multi_reduction <add>, %84, %cst_74 [0] : vector<80x128xf32> to vector<128xf32>
    %86 = vector.shape_cast %85 : vector<128xf32> to vector<1x1x128xf32>
    %c0_75 = arith.constant 0 : index
    %c0_76 = arith.constant 0 : index
    %c0_77 = arith.constant 0 : index
    %87 = vector.load %arg5[%c0_75, %c0_76, %c0_77] : memref<1x1x128xf32, #tpu.memory_space<vmem>>, vector<1x1x128xf32>
    tpu.vector_store %arg5[%c0_75, %c0_76, %c0_77], %86 {strides = array<i32>} : memref<1x1x128xf32, #tpu.memory_space<vmem>>, vector<1x1x128xf32>,
    return
  }
  func.func @transform_0(%arg0: i32) -> (i32, i32, i32) {
    %c0_i32 = arith.constant 0 : i32
    %c0_i32_0 = arith.constant 0 : i32
    %c0_i32_1 = arith.constant 0 : i32
    return %arg0, %c0_i32, %c0_i32_0 : i32, i32, i32
  }
  func.func @transform_1(%arg0: i32) -> (i32, i32, i32, i32) {
    %c0_i32 = arith.constant 0 : i32
    %c0_i32_0 = arith.constant 0 : i32
    %c0_i32_1 = arith.constant 0 : i32
    %c0_i32_2 = arith.constant 0 : i32
    %c0_i32_3 = arith.constant 0 : i32
    return %c0_i32, %c0_i32_0, %c0_i32_1, %c0_i32_2 : i32, i32, i32, i32
  }
  func.func @transform_2(%arg0: i32) -> (i32, i32, i32) {
    %c0_i32 = arith.constant 0 : i32
    %c0_i32_0 = arith.constant 0 : i32
    %c0_i32_1 = arith.constant 0 : i32
    return %arg0, %c0_i32, %c0_i32_0 : i32, i32, i32
  }
  func.func @transform_3(%arg0: i32) -> (i32, i32, i32) {
    %c0_i32 = arith.constant 0 : i32
    %c0_i32_0 = arith.constant 0 : i32
    %c0_i32_1 = arith.constant 0 : i32
    return %arg0, %c0_i32, %c0_i32_0 : i32, i32, i32
  }
  func.func @transform_4(%arg0: i32) -> (i32, i32, i32) {
    %c0_i32 = arith.constant 0 : i32
    %c0_i32_0 = arith.constant 0 : i32
    %c0_i32_1 = arith.constant 0 : i32
    return %arg0, %c0_i32, %c0_i32_0 : i32, i32, i32
  }
}

</mosaic_0001>

<llo_original>
// kernel: downblock_forward.3
$region0: #{downblock_forward.3}
  #allocation0 [shape = 'u32[]', space=smem, size = 0x4, offset = 0x4, fixed_abs, tag = 'smem constant byte address 0x4 - core index']
  #allocation1 [shape = 'u32[72,128]{1,0:T(1,128)}', space=vmem, size = 0x9000, scoped, tag = 'internal scratch']
  %s0 = inlined_call_operand.vmem [shape: f32[2,8,2,8,8], index: 0, kind: input, shape index: {}]
  %s1 = inlined_call_operand.vmem [shape: f32[2,8,8,4], index: 1, kind: output, shape index: {}]
  %s2 = sld [smem:[#allocation0]]
  $region37: #{downblock_forward.3} parent=0
    _
  %s4 = ssub.s32 1, %s2
  %s5 = scalar_select 0, %s4, %s2
  loop: start=0, step=1, limit=4
  $region2: #{downblock_forward.3} parent=0 // loop_pre_header
    _
  $region3: #{downblock_forward.3} parent=0 // loop_header
    %s7 = sphi 0, %s11
    %p8 = scmp.ge.s32.totalorder %s7, 4
    %s17 = sphi 0, %s19
    %s20 = sphi 0, %s17
    %s21 = sphi 0, %s20
    %s37 = sphi 0, %s21
    %s43 = sphi 0, %s45
    %s46 = sphi 0, %s43
    %s47 = sphi 0, %s46
    %s63 = sphi 0, %s47
  $region4: #{downblock_forward.3} parent=0 // loop_header_branch
    %10 = sbr.rel (%p8) target = $region8
  $region5: #{downblock_forward.3} parent=0 // loop_body
    %s12 = ssub.s32 %s7, 1
    %s13 = ssub.s32 %s7, 2
    %s14 = sadd.s32 %s7, 1
    %s15 = ssub.s32 %s7, %s14
    %p16 = scmp.eq.s32.totalorder %s15, 0
    %s18 = sadd.s32 %s17, 1
    %s19 = scalar_select %p16, %s17, %s18
    %p22 = pneg %p16
    %p23 = scmp.eq.s32.totalorder %s7, 1
    %p24 = por %p22, %p23
    %p25 = scmp.ne.s32.totalorder %s17, %s20
    %p26 = scmp.eq.s32.totalorder %s7, 0
    %p27 = por %p25, %p26
    %p28 = scmp.ne.s32.totalorder %s17, %s20
    %p29 = scmp.eq.s32.totalorder %s12, 1
    %p30 = por %p28, %p29
    %p31 = scmp.ne.s32.totalorder %s20, %s21
    %p32 = scmp.eq.s32.totalorder %s12, 0
    %p33 = por %p31, %p32
    %p34 = scmp.ne.s32.totalorder %s20, %s21
    %p35 = scmp.eq.s32.totalorder %s13, 1
    %p36 = por %p34, %p35
    %p38 = scmp.ne.s32.totalorder %s21, %s37
    %p39 = scmp.eq.s32.totalorder %s13, 0
    %p40 = por %p38, %p39
    %s41 = ssub.s32 %s7, %s14
    %p42 = scmp.eq.s32.totalorder %s41, 0
    %s44 = sadd.s32 %s43, 1
    %s45 = scalar_select %p42, %s43, %s44
    %p48 = pneg %p42
    %p49 = scmp.eq.s32.totalorder %s7, 1
    %p50 = por %p48, %p49
    %p51 = scmp.ne.s32.totalorder %s43, %s46
    %p52 = scmp.eq.s32.totalorder %s7, 0
    %p53 = por %p51, %p52
    %p54 = scmp.ne.s32.totalorder %s43, %s46
    %p55 = scmp.eq.s32.totalorder %s12, 1
    %p56 = por %p54, %p55
    %p57 = scmp.ne.s32.totalorder %s46, %s47
    %p58 = scmp.eq.s32.totalorder %s12, 0
    %p59 = por %p57, %p58
    %p60 = scmp.ne.s32.totalorder %s46, %s47
    %p61 = scmp.eq.s32.totalorder %s13, 1
    %p62 = por %p60, %p61
    %p64 = scmp.ne.s32.totalorder %s47, %s63
    %p65 = scmp.eq.s32.totalorder %s13, 0
    %p66 = por %p64, %p65
    %p67 = scmp.le.s32.totalorder 1, %s7
    %p68 = scmp.lt.s32.totalorder %s7, 3
    %p69 = pnand %p67, %p68
    %p70 = pneg %p69
    // Predicated region
    $region9: #{downblock_forward.3} parent=5 // pred_check
      _
    $region10: #{downblock_forward.3} parent=5 // pred_check_branch
      %72 = sbr.rel (%p69) target = $region12
    $region11: #{downblock_forward.3} parent=5 // pred_region
      %s73 = ssub.s32 %s7, 1
    $region12: #{downblock_forward.3} parent=5 // pred_fallthru
      _
    %p74 = scmp.lt.s32.totalorder %s7, 2
    // Predicated region
    $region13: #{downblock_forward.3} parent=5 // pred_check
      %p75 = pneg %p74
    $region14: #{downblock_forward.3} parent=5 // pred_check_branch
      %77 = sbr.rel (%p75) target = $region16
    $region15: #{downblock_forward.3} parent=5 // pred_region
      // Predicated region
      $region17: #{downblock_forward.3} parent=15 // pred_check
        %p78 = pneg %p27
      $region18: #{downblock_forward.3} parent=15 // pred_check_branch
        %80 = sbr.rel (%p78) target = $region20
      $region19: #{downblock_forward.3} parent=15 // pred_region
        %p81 = scmp.lt.s32.totalorder %s7, 1
        %s82 = scalar_select %p81, %s7, 1
        %s83 = smul.addr %s82, 16
        %s84 = smul.addr %s83, 8
        %s85 = scalar_lea.vmem %s0, %s84
      $region20: #{downblock_forward.3} parent=15 // pred_fallthru
        _
    $region16: #{downblock_forward.3} parent=5 // pred_fallthru
      _
    %p86 = scmp.le.s32.totalorder 1, %s7
    %p87 = scmp.lt.s32.totalorder %s7, 3
    %p88 = pnand %p86, %p87
    %p89 = pneg %p88
    // Predicated region
    $region21: #{downblock_forward.3} parent=5 // pred_check
      _
    $region22: #{downblock_forward.3} parent=5 // pred_check_branch
      %91 = sbr.rel (%p88) target = $region24
    $region23: #{downblock_forward.3} parent=5 // pred_region
      %s92 = ssub.s32 %s7, 1
      %p93 = scmp.lt.s32.totalorder %s12, 1
      %s94 = scalar_select %p93, %s12, 1
      %s95 = smul.addr %s94, 16
      %s96 = smul.addr %s95, 8
      %s97 = scalar_lea.vmem %s0, %s96
      %p98 = pneg %p33
      %p99 = pneg %p30
      %p100 = pneg %p59
      %p101 = pneg %p56
      %p102 = scmp.lt.s32.totalorder %s12, 1
      %s103 = scalar_select %p102, %s12, 1
      %s104 = smul.addr %s103, 8
      %s105 = smul.addr %s104, 8
      %s106 = scalar_lea.vmem %s1, %s105
      %p107 = scmp.lt.s32.totalorder %s12, 1
      %s108 = scalar_select %p107, %s12, 1
      %s109 = smul.addr %s108, 16
      %s110 = smul.addr %s109, 8
      %s111 = scalar_lea.vmem %s0, %s110
      %p112 = scmp.lt.s32.totalorder %s12, 1
      %s113 = scalar_select %p112, %s12, 1
      %s114 = smul.addr %s113, 8
      %s115 = smul.addr %s114, 8
      %s116 = scalar_lea.vmem %s1, %s115
      %v117 = vld [vmem:[%s111] sm:$0xff]
      %v118 = vld [vmem:[%s111 + $0x8] sm:$0xff]
      %v119 = vld [vmem:[%s111 + $0x10] sm:$0xff]
      %v120 = vld [vmem:[%s111 + $0x18] sm:$0xff]
      %v121 = vld [vmem:[%s111 + $0x20] sm:$0xff]
      %v122 = vld [vmem:[%s111 + $0x28] sm:$0xff]
      %v123 = vld [vmem:[%s111 + $0x30] sm:$0xff]
      %v124 = vld [vmem:[%s111 + $0x38] sm:$0xff]
      %v125 = vld [vmem:[%s111 + $0x40] sm:$0xff]
      %v126 = vld [vmem:[%s111 + $0x48] sm:$0xff]
      %v127 = vld [vmem:[%s111 + $0x50] sm:$0xff]
      %v128 = vld [vmem:[%s111 + $0x58] sm:$0xff]
      %v129 = vld [vmem:[%s111 + $0x60] sm:$0xff]
      %v130 = vld [vmem:[%s111 + $0x68] sm:$0xff]
      %v131 = vld [vmem:[%s111 + $0x70] sm:$0xff]
      %v132 = vld [vmem:[%s111 + $0x78] sm:$0xff]
      %v133 = vmax.f32 %v117, %v118
      %v134 = vmax.f32 %v119, %v120
      %v135 = vmax.f32 %v121, %v122
      %v136 = vmax.f32 %v123, %v124
      %v137 = vmax.f32 %v125, %v126
      %v138 = vmax.f32 %v127, %v128
      %v139 = vmax.f32 %v129, %v130
      %v140 = vmax.f32 %v131, %v132
      %149 = vrot.lane.b32.xlu0 %v133, 124
      %v150 = vpop.permute.xlu0 %149
      %151 = vrot.lane.b32.xlu0 %v134, 124
      %v152 = vpop.permute.xlu0 %151
      %153 = vrot.lane.b32.xlu0 %v135, 124
      %v154 = vpop.permute.xlu0 %153
      %155 = vrot.lane.b32.xlu0 %v136, 124
      %v156 = vpop.permute.xlu0 %155
      %157 = vrot.lane.b32.xlu0 %v137, 124
      %v158 = vpop.permute.xlu0 %157
      %159 = vrot.lane.b32.xlu0 %v138, 124
      %v160 = vpop.permute.xlu0 %159
      %161 = vrot.lane.b32.xlu0 %v139, 124
      %v162 = vpop.permute.xlu0 %161
      %163 = vrot.lane.b32.xlu0 %v140, 124
      %v164 = vpop.permute.xlu0 %163
      %v173 = vmax.f32 %v133, %v150
      %v174 = vmax.f32 %v134, %v152
      %v175 = vmax.f32 %v135, %v154
      %v176 = vmax.f32 %v136, %v156
      %v177 = vmax.f32 %v137, %v158
      %v178 = vmax.f32 %v138, %v160
      %v179 = vmax.f32 %v139, %v162
      %v180 = vmax.f32 %v140, %v164
      %vm181 = vcmask 31744
      %182 = vst.msk [vmem:[%s116] sm:$0xff] %vm181, %v173
      %183 = vst.msk [vmem:[%s116 + $0x8] sm:$0xff] %vm181, %v174
      %184 = vst.msk [vmem:[%s116 + $0x10] sm:$0xff] %vm181, %v175
      %185 = vst.msk [vmem:[%s116 + $0x18] sm:$0xff] %vm181, %v176
      %186 = vst.msk [vmem:[%s116 + $0x20] sm:$0xff] %vm181, %v177
      %187 = vst.msk [vmem:[%s116 + $0x28] sm:$0xff] %vm181, %v178
      %188 = vst.msk [vmem:[%s116 + $0x30] sm:$0xff] %vm181, %v179
      %189 = vst.msk [vmem:[%s116 + $0x38] sm:$0xff] %vm181, %v180
      %p190 = scmp.lt.s32.totalorder %s12, 1
      %s191 = scalar_select %p190, %s12, 1
      %s192 = smul.addr %s191, 8
      %s193 = smul.addr %s192, 8
      %s194 = scalar_lea.vmem %s1, %s193
      // Predicated region
      $region25: #{downblock_forward.3} parent=23 // pred_check
        %p195 = pneg %p56
      $region26: #{downblock_forward.3} parent=23 // pred_check_branch
        %197 = sbr.rel (%p195) target = $region28
      $region27: #{downblock_forward.3} parent=23 // pred_region
        _
      $region28: #{downblock_forward.3} parent=23 // pred_fallthru
        _
    $region24: #{downblock_forward.3} parent=5 // pred_fallthru
      _
    %p198 = scmp.le.s32.totalorder 2, %s7
    // Predicated region
    $region29: #{downblock_forward.3} parent=5 // pred_check
      %p199 = pneg %p198
    $region30: #{downblock_forward.3} parent=5 // pred_check_branch
      %201 = sbr.rel (%p199) target = $region32
    $region31: #{downblock_forward.3} parent=5 // pred_region
      %s202 = ssub.s32 %s7, 2
      // Predicated region
      $region33: #{downblock_forward.3} parent=31 // pred_check
        %p203 = pneg %p62
      $region34: #{downblock_forward.3} parent=31 // pred_check_branch
        %205 = sbr.rel (%p203) target = $region36
      $region35: #{downblock_forward.3} parent=31 // pred_region
        %p206 = scmp.lt.s32.totalorder %s13, 1
        %s207 = scalar_select %p206, %s13, 1
        %s208 = smul.addr %s207, 8
        %s209 = smul.addr %s208, 8
        %s210 = scalar_lea.vmem %s1, %s209
      $region36: #{downblock_forward.3} parent=31 // pred_fallthru
        _
    $region32: #{downblock_forward.3} parent=5 // pred_fallthru
      _
  $region6: #{downblock_forward.3} parent=0 // loop_footer
    %s11 = sadd.s32 1, %s7
  $region7: #{downblock_forward.3} parent=0 // loop_footer_branch
    %6 = sbr.rel target = $region3
  $region8: #{downblock_forward.3} parent=0 // loop_exit
    _

// kernel: downblock_forward.5
$region0: #{downblock_forward.5}
  #allocation0 [shape = 'u32[]', space=smem, size = 0x4, offset = 0x4, fixed_abs, tag = 'smem constant byte address 0x4 - core index']
  #allocation1 [shape = 'u32[72,128]{1,0:T(1,128)}', space=vmem, size = 0x9000, scoped, tag = 'internal scratch']
  %s0 = inlined_call_operand.vmem [shape: f32[2,80,128], index: 0, kind: input, shape index: {}]
  %s1 = inlined_call_operand.vmem [shape: f32[1,128], index: 1, kind: input, shape index: {}]
  %s2 = inlined_call_operand.vmem [shape: f32[1,128], index: 2, kind: input, shape index: {}]
  %s3 = inlined_call_operand.vmem [shape: f32[2,104,128], index: 3, kind: output, shape index: {}]
  %s4 = sld [smem:[#allocation0]]
  $region45: #{downblock_forward.5} parent=0
    _
  %s6 = ssub.s32 1, %s4
  %s7 = scalar_select 0, %s6, %s4
  loop: start=0, step=1, limit=4
  $region2: #{downblock_forward.5} parent=0 // loop_pre_header
    _
  $region3: #{downblock_forward.5} parent=0 // loop_header
    %s9 = sphi 0, %s13
    %p10 = scmp.ge.s32.totalorder %s9, 4
    %s19 = sphi 0, %s21
    %s22 = sphi 0, %s19
    %s23 = sphi 0, %s22
    %s39 = sphi 0, %s23
    %s43 = sphi 0, %s43
    %s45 = sphi 0, %s43
    %s46 = sphi 0, %s45
    %s60 = sphi 0, %s46
    %s64 = sphi 0, %s64
    %s66 = sphi 0, %s64
    %s67 = sphi 0, %s66
    %s81 = sphi 0, %s67
    %s87 = sphi 0, %s89
    %s90 = sphi 0, %s87
    %s91 = sphi 0, %s90
    %s107 = sphi 0, %s91
  $region4: #{downblock_forward.5} parent=0 // loop_header_branch
    %12 = sbr.rel (%p10) target = $region8
  $region5: #{downblock_forward.5} parent=0 // loop_body
    %s14 = ssub.s32 %s9, 1
    %s15 = ssub.s32 %s9, 2
    %s16 = sadd.s32 %s9, 1
    %s17 = ssub.s32 %s9, %s16
    %p18 = scmp.eq.s32.totalorder %s17, 0
    %s20 = sadd.s32 %s19, 1
    %s21 = scalar_select %p18, %s19, %s20
    %p24 = pneg %p18
    %p25 = scmp.eq.s32.totalorder %s9, 1
    %p26 = por %p24, %p25
    %p27 = scmp.ne.s32.totalorder %s19, %s22
    %p28 = scmp.eq.s32.totalorder %s9, 0
    %p29 = por %p27, %p28
    %p30 = scmp.ne.s32.totalorder %s19, %s22
    %p31 = scmp.eq.s32.totalorder %s14, 1
    %p32 = por %p30, %p31
    %p33 = scmp.ne.s32.totalorder %s22, %s23
    %p34 = scmp.eq.s32.totalorder %s14, 0
    %p35 = por %p33, %p34
    %p36 = scmp.ne.s32.totalorder %s22, %s23
    %p37 = scmp.eq.s32.totalorder %s15, 1
    %p38 = por %p36, %p37
    %p40 = scmp.ne.s32.totalorder %s23, %s39
    %p41 = scmp.eq.s32.totalorder %s15, 0
    %p42 = por %p40, %p41
    %s44 = sadd.s32 %s43, 1
    %p47 = scmp.eq.s32.totalorder %s9, 1
    %p48 = scmp.ne.s32.totalorder %s43, %s45
    %p49 = scmp.eq.s32.totalorder %s9, 0
    %p50 = por %p48, %p49
    %p51 = scmp.ne.s32.totalorder %s43, %s45
    %p52 = scmp.eq.s32.totalorder %s14, 1
    %p53 = por %p51, %p52
    %p54 = scmp.ne.s32.totalorder %s45, %s46
    %p55 = scmp.eq.s32.totalorder %s14, 0
    %p56 = por %p54, %p55
    %p57 = scmp.ne.s32.totalorder %s45, %s46
    %p58 = scmp.eq.s32.totalorder %s15, 1
    %p59 = por %p57, %p58
    %p61 = scmp.ne.s32.totalorder %s46, %s60
    %p62 = scmp.eq.s32.totalorder %s15, 0
    %p63 = por %p61, %p62
    %s65 = sadd.s32 %s64, 1
    %p68 = scmp.eq.s32.totalorder %s9, 1
    %p69 = scmp.ne.s32.totalorder %s64, %s66
    %p70 = scmp.eq.s32.totalorder %s9, 0
    %p71 = por %p69, %p70
    %p72 = scmp.ne.s32.totalorder %s64, %s66
    %p73 = scmp.eq.s32.totalorder %s14, 1
    %p74 = por %p72, %p73
    %p75 = scmp.ne.s32.totalorder %s66, %s67
    %p76 = scmp.eq.s32.totalorder %s14, 0
    %p77 = por %p75, %p76
    %p78 = scmp.ne.s32.totalorder %s66, %s67
    %p79 = scmp.eq.s32.totalorder %s15, 1
    %p80 = por %p78, %p79
    %p82 = scmp.ne.s32.totalorder %s67, %s81
    %p83 = scmp.eq.s32.totalorder %s15, 0
    %p84 = por %p82, %p83
    %s85 = ssub.s32 %s9, %s16
    %p86 = scmp.eq.s32.totalorder %s85, 0
    %s88 = sadd.s32 %s87, 1
    %s89 = scalar_select %p86, %s87, %s88
    %p92 = pneg %p86
    %p93 = scmp.eq.s32.totalorder %s9, 1
    %p94 = por %p92, %p93
    %p95 = scmp.ne.s32.totalorder %s87, %s90
    %p96 = scmp.eq.s32.totalorder %s9, 0
    %p97 = por %p95, %p96
    %p98 = scmp.ne.s32.totalorder %s87, %s90
    %p99 = scmp.eq.s32.totalorder %s14, 1
    %p100 = por %p98, %p99
    %p101 = scmp.ne.s32.totalorder %s90, %s91
    %p102 = scmp.eq.s32.totalorder %s14, 0
    %p103 = por %p101, %p102
    %p104 = scmp.ne.s32.totalorder %s90, %s91
    %p105 = scmp.eq.s32.totalorder %s15, 1
    %p106 = por %p104, %p105
    %p108 = scmp.ne.s32.totalorder %s91, %s107
    %p109 = scmp.eq.s32.totalorder %s15, 0
    %p110 = por %p108, %p109
    %p111 = scmp.le.s32.totalorder 1, %s9
    %p112 = scmp.lt.s32.totalorder %s9, 3
    %p113 = pnand %p111, %p112
    %p114 = pneg %p113
    // Predicated region
    $region9: #{downblock_forward.5} parent=5 // pred_check
      _
    $region10: #{downblock_forward.5} parent=5 // pred_check_branch
      %116 = sbr.rel (%p113) target = $region12
    $region11: #{downblock_forward.5} parent=5 // pred_region
      %s117 = ssub.s32 %s9, 1
      // Predicated region
      $region13: #{downblock_forward.5} parent=11 // pred_check
        %p118 = pneg %p56
      $region14: #{downblock_forward.5} parent=11 // pred_check_branch
        %120 = sbr.rel (%p118) target = $region16
      $region15: #{downblock_forward.5} parent=11 // pred_region
        _
      $region16: #{downblock_forward.5} parent=11 // pred_fallthru
        _
      // Predicated region
      $region17: #{downblock_forward.5} parent=11 // pred_check
        %p121 = pneg %p77
      $region18: #{downblock_forward.5} parent=11 // pred_check_branch
        %123 = sbr.rel (%p121) target = $region20
      $region19: #{downblock_forward.5} parent=11 // pred_region
        _
      $region20: #{downblock_forward.5} parent=11 // pred_fallthru
        _
    $region12: #{downblock_forward.5} parent=5 // pred_fallthru
      _
    %p124 = scmp.lt.s32.totalorder %s9, 2
    // Predicated region
    $region21: #{downblock_forward.5} parent=5 // pred_check
      %p125 = pneg %p124
    $region22: #{downblock_forward.5} parent=5 // pred_check_branch
      %127 = sbr.rel (%p125) target = $region24
    $region23: #{downblock_forward.5} parent=5 // pred_region
      // Predicated region
      $region25: #{downblock_forward.5} parent=23 // pred_check
        %p128 = pneg %p29
      $region26: #{downblock_forward.5} parent=23 // pred_check_branch
        %130 = sbr.rel (%p128) target = $region28
      $region27: #{downblock_forward.5} parent=23 // pred_region
        %p131 = scmp.lt.s32.totalorder %s9, 1
        %s132 = scalar_select %p131, %s9, 1
        %s133 = smul.addr %s132, 10
        %s134 = smul.addr %s133, 8
        %s135 = scalar_lea.vmem %s0, %s134
      $region28: #{downblock_forward.5} parent=23 // pred_fallthru
        _
    $region24: #{downblock_forward.5} parent=5 // pred_fallthru
      _
    %p136 = scmp.le.s32.totalorder 1, %s9
    %p137 = scmp.lt.s32.totalorder %s9, 3
    %p138 = pnand %p136, %p137
    %p139 = pneg %p138
    // Predicated region
    $region29: #{downblock_forward.5} parent=5 // pred_check
      _
    $region30: #{downblock_forward.5} parent=5 // pred_check_branch
      %141 = sbr.rel (%p138) target = $region32
    $region31: #{downblock_forward.5} parent=5 // pred_region
      %s142 = ssub.s32 %s9, 1
      %p143 = scmp.lt.s32.totalorder %s14, 1
      %s144 = scalar_select %p143, %s14, 1
      %s145 = smul.addr %s144, 10
      %s146 = smul.addr %s145, 8
      %s147 = scalar_lea.vmem %s0, %s146
      %p148 = pneg %p35
      %p149 = pneg %p32
      %p150 = pneg %p56
      %p151 = pneg %p53
      %p152 = pneg %p77
      %p153 = pneg %p74
      %p154 = pneg %p103
      %p155 = pneg %p100
      %p156 = scmp.lt.s32.totalorder %s14, 1
      %s157 = scalar_select %p156, %s14, 1
      %s158 = smul.addr %s157, 13
      %s159 = smul.addr %s158, 8
      %s160 = scalar_lea.vmem %s3, %s159
      %p161 = scmp.lt.s32.totalorder %s14, 1
      %s162 = scalar_select %p161, %s14, 1
      %s163 = smul.addr %s162, 10
      %s164 = smul.addr %s163, 8
      %s165 = scalar_lea.vmem %s0, %s164
      %p166 = scmp.lt.s32.totalorder %s14, 1
      %s167 = scalar_select %p166, %s14, 1
      %s168 = smul.addr %s167, 13
      %s169 = smul.addr %s168, 8
      %s170 = scalar_lea.vmem %s3, %s169
      %v171 = vld [vmem:[%s165] sm:$0xff]
      %v172 = vld [vmem:[%s165 + $0x8] sm:$0xff]
      %v173 = vld [vmem:[%s165 + $0x10] sm:$0xff]
      %v174 = vld [vmem:[%s165 + $0x18] sm:$0xff]
      %v175 = vld [vmem:[%s165 + $0x20] sm:$0xff]
      %v176 = vld [vmem:[%s165 + $0x28] sm:$0xff]
      %v177 = vld [vmem:[%s165 + $0x30] sm:$0xff]
      %v178 = vld [vmem:[%s165 + $0x38] sm:$0xff]
      %v179 = vld [vmem:[%s165 + $0x40] sm:$0xff]
      %v180 = vld [vmem:[%s165 + $0x48] sm:$0xff]
      %v181 = vlaneseq
      %v182 = vshrl.u32 %v181, 7
      %v183 = vadd.s32 %v182, 8
      %v184 = vadd.s32 %v182, 16
      %v185 = vadd.s32 %v182, 24
      %v186 = vadd.s32 %v182, 32
      %v187 = vadd.s32 %v182, 40
      %v188 = vadd.s32 %v182, 48
      %v189 = vadd.s32 %v182, 56
      %v190 = vadd.s32 %v182, 64
      %v191 = vadd.s32 %v182, 72
      %vm192 = vcmp.lt.s32.totalorder %v182, 0
      %v193 = vsub.s32 0, %v182
      %v194 = vsel %vm192, %v193, %v182
      %v195 = vand.u32 %v194, 65535
      %v196 = vshrl.u32 %v194, 16
      %v198 = vmul.u32 %v195, 52429
      %v199 = vmul.u32 %v195, 52428
      %v200 = vmul.u32 %v196, 52429
      %v201 = vmul.u32 %v196, 52428
      %v202 = vshll.u32 %v199, 16
      %v203 = vshrl.u32 %v199, 16
      %v204 = vshll.u32 %v200, 16
      %v205 = vshrl.u32 %v200, 16
      %vm206 = vc.u32 %v198, %v202
      %v207 = vsel %vm206, 1, 0
      %v208 = vadd.s32 %v198, %v202
      %v209 = vadd.s32 %v201, %v207
      %vm210 = vc.u32 %v208, %v204
      %v211 = vsel %vm210, 1, 0
      %v212 = vadd.s32 %v208, %v204
      %v213 = vadd.s32 %v209, %v211
      %v214 = vadd.s32 %v213, %v203
      %v215 = vadd.s32 %v214, %v205
      %v216 = vshrl.u32 %v215, 3
      %v217 = vmul.u32 %v216, 10
      %v218 = vsub.s32 %v194, %v217
      %v219 = vsub.s32 0, %v218
      %v220 = vsel %vm192, %v219, %v218
      %vm221 = vcmp.lt.s32.totalorder %v183, 0
      %v222 = vsub.s32 0, %v183
      %v223 = vsel %vm221, %v222, %v183
      %v224 = vand.u32 %v223, 65535
      %v225 = vshrl.u32 %v223, 16
      %v227 = vmul.u32 %v224, 52429
      %v228 = vmul.u32 %v224, 52428
      %v229 = vmul.u32 %v225, 52429
      %v230 = vmul.u32 %v225, 52428
      %v231 = vshll.u32 %v228, 16
      %v232 = vshrl.u32 %v228, 16
      %v233 = vshll.u32 %v229, 16
      %v234 = vshrl.u32 %v229, 16
      %vm235 = vc.u32 %v227, %v231
      %v236 = vsel %vm235, 1, 0
      %v237 = vadd.s32 %v227, %v231
      %v238 = vadd.s32 %v230, %v236
      %vm239 = vc.u32 %v237, %v233
      %v240 = vsel %vm239, 1, 0
      %v241 = vadd.s32 %v237, %v233
      %v242 = vadd.s32 %v238, %v240
      %v243 = vadd.s32 %v242, %v232
      %v244 = vadd.s32 %v243, %v234
      %v245 = vshrl.u32 %v244, 3
      %v246 = vmul.u32 %v245, 10
      %v247 = vsub.s32 %v223, %v246
      %v248 = vsub.s32 0, %v247
      %v249 = vsel %vm221, %v248, %v247
      %vm250 = vcmp.lt.s32.totalorder %v184, 0
      %v251 = vsub.s32 0, %v184
      %v252 = vsel %vm250, %v251, %v184
      %v253 = vand.u32 %v252, 65535
      %v254 = vshrl.u32 %v252, 16
      %v256 = vmul.u32 %v253, 52429
      %v257 = vmul.u32 %v253, 52428
      %v258 = vmul.u32 %v254, 52429
      %v259 = vmul.u32 %v254, 52428
      %v260 = vshll.u32 %v257, 16
      %v261 = vshrl.u32 %v257, 16
      %v262 = vshll.u32 %v258, 16
      %v263 = vshrl.u32 %v258, 16
      %vm264 = vc.u32 %v256, %v260
      %v265 = vsel %vm264, 1, 0
      %v266 = vadd.s32 %v256, %v260
      %v267 = vadd.s32 %v259, %v265
      %vm268 = vc.u32 %v266, %v262
      %v269 = vsel %vm268, 1, 0
      %v270 = vadd.s32 %v266, %v262
      %v271 = vadd.s32 %v267, %v269
      %v272 = vadd.s32 %v271, %v261
      %v273 = vadd.s32 %v272, %v263
      %v274 = vshrl.u32 %v273, 3
      %v275 = vmul.u32 %v274, 10
      %v276 = vsub.s32 %v252, %v275
      %v277 = vsub.s32 0, %v276
      %v278 = vsel %vm250, %v277, %v276
      %vm279 = vcmp.lt.s32.totalorder %v185, 0
      %v280 = vsub.s32 0, %v185
      %v281 = vsel %vm279, %v280, %v185
      %v282 = vand.u32 %v281, 65535
      %v283 = vshrl.u32 %v281, 16
      %v285 = vmul.u32 %v282, 52429
      %v286 = vmul.u32 %v282, 52428
      %v287 = vmul.u32 %v283, 52429
      %v288 = vmul.u32 %v283, 52428
      %v289 = vshll.u32 %v286, 16
      %v290 = vshrl.u32 %v286, 16
      %v291 = vshll.u32 %v287, 16
      %v292 = vshrl.u32 %v287, 16
      %vm293 = vc.u32 %v285, %v289
      %v294 = vsel %vm293, 1, 0
      %v295 = vadd.s32 %v285, %v289
      %v296 = vadd.s32 %v288, %v294
      %vm297 = vc.u32 %v295, %v291
      %v298 = vsel %vm297, 1, 0
      %v299 = vadd.s32 %v295, %v291
      %v300 = vadd.s32 %v296, %v298
      %v301 = vadd.s32 %v300, %v290
      %v302 = vadd.s32 %v301, %v292
      %v303 = vshrl.u32 %v302, 3
      %v304 = vmul.u32 %v303, 10
      %v305 = vsub.s32 %v281, %v304
      %v306 = vsub.s32 0, %v305
      %v307 = vsel %vm279, %v306, %v305
      %vm308 = vcmp.lt.s32.totalorder %v186, 0
      %v309 = vsub.s32 0, %v186
      %v310 = vsel %vm308, %v309, %v186
      %v311 = vand.u32 %v310, 65535
      %v312 = vshrl.u32 %v310, 16
      %v314 = vmul.u32 %v311, 52429
      %v315 = vmul.u32 %v311, 52428
      %v316 = vmul.u32 %v312, 52429
      %v317 = vmul.u32 %v312, 52428
      %v318 = vshll.u32 %v315, 16
      %v319 = vshrl.u32 %v315, 16
      %v320 = vshll.u32 %v316, 16
      %v321 = vshrl.u32 %v316, 16
      %vm322 = vc.u32 %v314, %v318
      %v323 = vsel %vm322, 1, 0
      %v324 = vadd.s32 %v314, %v318
      %v325 = vadd.s32 %v317, %v323
      %vm326 = vc.u32 %v324, %v320
      %v327 = vsel %vm326, 1, 0
      %v328 = vadd.s32 %v324, %v320
      %v329 = vadd.s32 %v325, %v327
      %v330 = vadd.s32 %v329, %v319
      %v331 = vadd.s32 %v330, %v321
      %v332 = vshrl.u32 %v331, 3
      %v333 = vmul.u32 %v332, 10
      %v334 = vsub.s32 %v310, %v333
      %v335 = vsub.s32 0, %v334
      %v336 = vsel %vm308, %v335, %v334
      %vm337 = vcmp.lt.s32.totalorder %v187, 0
      %v338 = vsub.s32 0, %v187
      %v339 = vsel %vm337, %v338, %v187
      %v340 = vand.u32 %v339, 65535
      %v341 = vshrl.u32 %v339, 16
      %v343 = vmul.u32 %v340, 52429
      %v344 = vmul.u32 %v340, 52428
      %v345 = vmul.u32 %v341, 52429
      %v346 = vmul.u32 %v341, 52428
      %v347 = vshll.u32 %v344, 16
      %v348 = vshrl.u32 %v344, 16
      %v349 = vshll.u32 %v345, 16
      %v350 = vshrl.u32 %v345, 16
      %vm351 = vc.u32 %v343, %v347
      %v352 = vsel %vm351, 1, 0
      %v353 = vadd.s32 %v343, %v347
      %v354 = vadd.s32 %v346, %v352
      %vm355 = vc.u32 %v353, %v349
      %v356 = vsel %vm355, 1, 0
      %v357 = vadd.s32 %v353, %v349
      %v358 = vadd.s32 %v354, %v356
      %v359 = vadd.s32 %v358, %v348
      %v360 = vadd.s32 %v359, %v350
      %v361 = vshrl.u32 %v360, 3
      %v362 = vmul.u32 %v361, 10
      %v363 = vsub.s32 %v339, %v362
      %v364 = vsub.s32 0, %v363
      %v365 = vsel %vm337, %v364, %v363
      %vm366 = vcmp.lt.s32.totalorder %v188, 0
      %v367 = vsub.s32 0, %v188
      %v368 = vsel %vm366, %v367, %v188
      %v369 = vand.u32 %v368, 65535
      %v370 = vshrl.u32 %v368, 16
      %v372 = vmul.u32 %v369, 52429
      %v373 = vmul.u32 %v369, 52428
      %v374 = vmul.u32 %v370, 52429
      %v375 = vmul.u32 %v370, 52428
      %v376 = vshll.u32 %v373, 16
      %v377 = vshrl.u32 %v373, 16
      %v378 = vshll.u32 %v374, 16
      %v379 = vshrl.u32 %v374, 16
      %vm380 = vc.u32 %v372, %v376
      %v381 = vsel %vm380, 1, 0
      %v382 = vadd.s32 %v372, %v376
      %v383 = vadd.s32 %v375, %v381
      %vm384 = vc.u32 %v382, %v378
      %v385 = vsel %vm384, 1, 0
      %v386 = vadd.s32 %v382, %v378
      %v387 = vadd.s32 %v383, %v385
      %v388 = vadd.s32 %v387, %v377
      %v389 = vadd.s32 %v388, %v379
      %v390 = vshrl.u32 %v389, 3
      %v391 = vmul.u32 %v390, 10
      %v392 = vsub.s32 %v368, %v391
      %v393 = vsub.s32 0, %v392
      %v394 = vsel %vm366, %v393, %v392
      %vm395 = vcmp.lt.s32.totalorder %v189, 0
      %v396 = vsub.s32 0, %v189
      %v397 = vsel %vm395, %v396, %v189
      %v398 = vand.u32 %v397, 65535
      %v399 = vshrl.u32 %v397, 16
      %v401 = vmul.u32 %v398, 52429
      %v402 = vmul.u32 %v398, 52428
      %v403 = vmul.u32 %v399, 52429
      %v404 = vmul.u32 %v399, 52428
      %v405 = vshll.u32 %v402, 16
      %v406 = vshrl.u32 %v402, 16
      %v407 = vshll.u32 %v403, 16
      %v408 = vshrl.u32 %v403, 16
      %vm409 = vc.u32 %v401, %v405
      %v410 = vsel %vm409, 1, 0
      %v411 = vadd.s32 %v401, %v405
      %v412 = vadd.s32 %v404, %v410
      %vm413 = vc.u32 %v411, %v407
      %v414 = vsel %vm413, 1, 0
      %v415 = vadd.s32 %v411, %v407
      %v416 = vadd.s32 %v412, %v414
      %v417 = vadd.s32 %v416, %v406
      %v418 = vadd.s32 %v417, %v408
      %v419 = vshrl.u32 %v418, 3
      %v420 = vmul.u32 %v419, 10
      %v421 = vsub.s32 %v397, %v420
      %v422 = vsub.s32 0, %v421
      %v423 = vsel %vm395, %v422, %v421
      %vm424 = vcmp.lt.s32.totalorder %v190, 0
      %v425 = vsub.s32 0, %v190
      %v426 = vsel %vm424, %v425, %v190
      %v427 = vand.u32 %v426, 65535
      %v428 = vshrl.u32 %v426, 16
      %v430 = vmul.u32 %v427, 52429
      %v431 = vmul.u32 %v427, 52428
      %v432 = vmul.u32 %v428, 52429
      %v433 = vmul.u32 %v428, 52428
      %v434 = vshll.u32 %v431, 16
      %v435 = vshrl.u32 %v431, 16
      %v436 = vshll.u32 %v432, 16
      %v437 = vshrl.u32 %v432, 16
      %vm438 = vc.u32 %v430, %v434
      %v439 = vsel %vm438, 1, 0
      %v440 = vadd.s32 %v430, %v434
      %v441 = vadd.s32 %v433, %v439
      %vm442 = vc.u32 %v440, %v436
      %v443 = vsel %vm442, 1, 0
      %v444 = vadd.s32 %v440, %v436
      %v445 = vadd.s32 %v441, %v443
      %v446 = vadd.s32 %v445, %v435
      %v447 = vadd.s32 %v446, %v437
      %v448 = vshrl.u32 %v447, 3
      %v449 = vmul.u32 %v448, 10
      %v450 = vsub.s32 %v426, %v449
      %v451 = vsub.s32 0, %v450
      %v452 = vsel %vm424, %v451, %v450
      %vm453 = vcmp.lt.s32.totalorder %v191, 0
      %v454 = vsub.s32 0, %v191
      %v455 = vsel %vm453, %v454, %v191
      %v456 = vand.u32 %v455, 65535
      %v457 = vshrl.u32 %v455, 16
      %v459 = vmul.u32 %v456, 52429
      %v460 = vmul.u32 %v456, 52428
      %v461 = vmul.u32 %v457, 52429
      %v462 = vmul.u32 %v457, 52428
      %v463 = vshll.u32 %v460, 16
      %v464 = vshrl.u32 %v460, 16
      %v465 = vshll.u32 %v461, 16
      %v466 = vshrl.u32 %v461, 16
      %vm467 = vc.u32 %v459, %v463
      %v468 = vsel %vm467, 1, 0
      %v469 = vadd.s32 %v459, %v463
      %v470 = vadd.s32 %v462, %v468
      %vm471 = vc.u32 %v469, %v465
      %v472 = vsel %vm471, 1, 0
      %v473 = vadd.s32 %v469, %v465
      %v474 = vadd.s32 %v470, %v472
      %v475 = vadd.s32 %v474, %v464
      %v476 = vadd.s32 %v475, %v466
      %v477 = vshrl.u32 %v476, 3
      %v478 = vmul.u32 %v477, 10
      %v479 = vsub.s32 %v455, %v478
      %v480 = vsub.s32 0, %v479
      %v481 = vsel %vm453, %v480, %v479
      %vm482 = vcmp.ne.s32.totalorder %v220, 0
      %vm483 = vcmp.ne.s32.totalorder %v249, 0
      %vm484 = vcmp.ne.s32.totalorder %v278, 0
      %vm485 = vcmp.ne.s32.totalorder %v307, 0
      %vm486 = vcmp.ne.s32.totalorder %v336, 0
      %vm487 = vcmp.ne.s32.totalorder %v365, 0
      %vm488 = vcmp.ne.s32.totalorder %v394, 0
      %vm489 = vcmp.ne.s32.totalorder %v423, 0
      %vm490 = vcmp.ne.s32.totalorder %v452, 0
      %vm491 = vcmp.ne.s32.totalorder %v481, 0
      %vm492 = vcmp.lt.s32.totalorder %v220, 0
      %vm493 = vcmp.lt.s32.totalorder %v249, 0
      %vm494 = vcmp.lt.s32.totalorder %v278, 0
      %vm495 = vcmp.lt.s32.totalorder %v307, 0
      %vm496 = vcmp.lt.s32.totalorder %v336, 0
      %vm497 = vcmp.lt.s32.totalorder %v365, 0
      %vm498 = vcmp.lt.s32.totalorder %v394, 0
      %vm499 = vcmp.lt.s32.totalorder %v423, 0
      %vm500 = vcmp.lt.s32.totalorder %v452, 0
      %vm501 = vcmp.lt.s32.totalorder %v481, 0
      %vm502 = vmand %vm492, %vm482
      %vm503 = vmand %vm493, %vm483
      %vm504 = vmand %vm494, %vm484
      %vm505 = vmand %vm495, %vm485
      %vm506 = vmand %vm496, %vm486
      %vm507 = vmand %vm497, %vm487
      %vm508 = vmand %vm498, %vm488
      %vm509 = vmand %vm499, %vm489
      %vm510 = vmand %vm500, %vm490
      %vm511 = vmand %vm501, %vm491
      %v512 = vadd.s32 %v220, 10
      %v513 = vadd.s32 %v249, 10
      %v514 = vadd.s32 %v278, 10
      %v515 = vadd.s32 %v307, 10
      %v516 = vadd.s32 %v336, 10
      %v517 = vadd.s32 %v365, 10
      %v518 = vadd.s32 %v394, 10
      %v519 = vadd.s32 %v423, 10
      %v520 = vadd.s32 %v452, 10
      %v521 = vadd.s32 %v481, 10
      %v522 = vsel %vm502, %v512, %v220
      %v523 = vsel %vm503, %v513, %v249
      %v524 = vsel %vm504, %v514, %v278
      %v525 = vsel %vm505, %v515, %v307
      %v526 = vsel %vm506, %v516, %v336
      %v527 = vsel %vm507, %v517, %v365
      %v528 = vsel %vm508, %v518, %v394
      %v529 = vsel %vm509, %v519, %v423
      %v530 = vsel %vm510, %v520, %v452
      %v531 = vsel %vm511, %v521, %v481
      %vm532 = vcmp.lt.s32.totalorder %v522, 8
      %vm533 = vcmp.lt.s32.totalorder %v523, 8
      %vm534 = vcmp.lt.s32.totalorder %v524, 8
      %vm535 = vcmp.lt.s32.totalorder %v525, 8
      %vm536 = vcmp.lt.s32.totalorder %v526, 8
      %vm537 = vcmp.lt.s32.totalorder %v527, 8
      %vm538 = vcmp.lt.s32.totalorder %v528, 8
      %vm539 = vcmp.lt.s32.totalorder %v529, 8
      %vm540 = vcmp.lt.s32.totalorder %v530, 8
      %vm541 = vcmp.lt.s32.totalorder %v531, 8
      %v542 = vld [vmem:[%s1] sm:$0x1]
      %v544 = vperm.slane %v542, 0
      %v546 = vmul.f32 %v171, %v544
      %v547 = vmul.f32 %v172, %v544
      %v548 = vmul.f32 %v173, %v544
      %v549 = vmul.f32 %v174, %v544
      %v550 = vmul.f32 %v175, %v544
      %v551 = vmul.f32 %v176, %v544
      %v552 = vmul.f32 %v177, %v544
      %v553 = vmul.f32 %v178, %v544
      %v554 = vmul.f32 %v179, %v544
      %v555 = vmul.f32 %v180, %v544
      %v556 = vld [vmem:[%s2] sm:$0x1]
      %v558 = vperm.slane %v556, 0
      %v560 = vadd.f32 %v546, %v558
      %v561 = vadd.f32 %v547, %v558
      %v562 = vadd.f32 %v548, %v558
      %v563 = vadd.f32 %v549, %v558
      %v564 = vadd.f32 %v550, %v558
      %v565 = vadd.f32 %v551, %v558
      %v566 = vadd.f32 %v552, %v558
      %v567 = vadd.f32 %v553, %v558
      %v568 = vadd.f32 %v554, %v558
      %v569 = vadd.f32 %v555, %v558
      %v570 = vmax.f32 %v560, 0.0
      %v571 = vmax.f32 %v561, 0.0
      %v572 = vmax.f32 %v562, 0.0
      %v573 = vmax.f32 %v563, 0.0
      %v574 = vmax.f32 %v564, 0.0
      %v575 = vmax.f32 %v565, 0.0
      %v576 = vmax.f32 %v566, 0.0
      %v577 = vmax.f32 %v567, 0.0
      %v578 = vmax.f32 %v568, 0.0
      %v579 = vmax.f32 %v569, 0.0
      %v580 = vsel %vm532, 1, 0
      %v581 = vsel %vm533, 1, 0
      %v582 = vsel %vm534, 1, 0
      %v583 = vsel %vm535, 1, 0
      %v584 = vsel %vm536, 1, 0
      %v585 = vsel %vm537, 1, 0
      %v586 = vsel %vm538, 1, 0
      %v587 = vsel %vm539, 1, 0
      %v588 = vsel %vm540, 1, 0
      %v589 = vsel %vm541, 1, 0
      %vm590 = vcmp.eq.s32.totalorder %v580, 1
      %vm591 = vcmp.eq.s32.totalorder %v581, 1
      %vm592 = vcmp.eq.s32.totalorder %v582, 1
      %vm593 = vcmp.eq.s32.totalorder %v583, 1
      %vm594 = vcmp.eq.s32.totalorder %v584, 1
      %vm595 = vcmp.eq.s32.totalorder %v585, 1
      %vm596 = vcmp.eq.s32.totalorder %v586, 1
      %vm597 = vcmp.eq.s32.totalorder %v587, 1
      %vm598 = vcmp.eq.s32.totalorder %v588, 1
      %vm599 = vcmp.eq.s32.totalorder %v589, 1
      %v600 = vsel %vm590, %v570, 0.0
      %v601 = vsel %vm591, %v571, 0.0
      %v602 = vsel %vm592, %v572, 0.0
      %v603 = vsel %vm593, %v573, 0.0
      %v604 = vsel %vm594, %v574, 0.0
      %v605 = vsel %vm595, %v575, 0.0
      %v606 = vsel %vm596, %v576, 0.0
      %v607 = vsel %vm597, %v577, 0.0
      %v608 = vsel %vm598, %v578, 0.0
      %v609 = vsel %vm599, %v579, 0.0
      %610 = vst [vmem:[%s170] sm:$0xff] 0.0
      %611 = vst [vmem:[%s170 + $0x8] sm:$0xff] 0.0
      %612 = vst [vmem:[%s170 + $0x10] sm:$0xff] 0.0
      %613 = vst [vmem:[%s170 + $0x18] sm:$0xff] 0.0
      %614 = vst [vmem:[%s170 + $0x20] sm:$0xff] 0.0
      %615 = vst [vmem:[%s170 + $0x28] sm:$0xff] 0.0
      %616 = vst [vmem:[%s170 + $0x30] sm:$0xff] 0.0
      %617 = vst [vmem:[%s170 + $0x38] sm:$0xff] 0.0
      %618 = vst [vmem:[%s170 + $0x40] sm:$0xff] 0.0
      %619 = vst [vmem:[%s170 + $0x48] sm:$0xff] 0.0
      %620 = vst [vmem:[%s170 + $0x50] sm:$0xff] 0.0
      %621 = vst [vmem:[%s170 + $0x58] sm:$0xff] 0.0
      %622 = vst [vmem:[%s170 + $0x60] sm:$0xff] 0.0
      %623 = vst [vmem:[%s170 + $0xb] sm:$0xff] %v600
      %624 = vst [vmem:[%s170 + $0x13] sm:$0xff] %v601
      %625 = vst [vmem:[%s170 + $0x1b] sm:$0xff] %v602
      %626 = vst [vmem:[%s170 + $0x23] sm:$0xff] %v603
      %627 = vst [vmem:[%s170 + $0x2b] sm:$0xff] %v604
      %628 = vst [vmem:[%s170 + $0x33] sm:$0xff] %v605
      %629 = vst [vmem:[%s170 + $0x3b] sm:$0xff] %v606
      %630 = vst [vmem:[%s170 + $0x43] sm:$0xff] %v607
      %631 = vst [vmem:[%s170 + $0x4b] sm:$0xff] %v608
      %632 = vst [vmem:[%s170 + $0x53] sm:$0xff] %v609
      %p633 = scmp.lt.s32.totalorder %s14, 1
      %s634 = scalar_select %p633, %s14, 1
      %s635 = smul.addr %s634, 13
      %s636 = smul.addr %s635, 8
      %s637 = scalar_lea.vmem %s3, %s636
      // Predicated region
      $region33: #{downblock_forward.5} parent=31 // pred_check
        %p638 = pneg %p100
      $region34: #{downblock_forward.5} parent=31 // pred_check_branch
        %640 = sbr.rel (%p638) target = $region36
      $region35: #{downblock_forward.5} parent=31 // pred_region
        _
      $region36: #{downblock_forward.5} parent=31 // pred_fallthru
        _
    $region32: #{downblock_forward.5} parent=5 // pred_fallthru
      _
    %p641 = scmp.le.s32.totalorder 2, %s9
    // Predicated region
    $region37: #{downblock_forward.5} parent=5 // pred_check
      %p642 = pneg %p641
    $region38: #{downblock_forward.5} parent=5 // pred_check_branch
      %644 = sbr.rel (%p642) target = $region40
    $region39: #{downblock_forward.5} parent=5 // pred_region
      %s645 = ssub.s32 %s9, 2
      // Predicated region
      $region41: #{downblock_forward.5} parent=39 // pred_check
        %p646 = pneg %p106
      $region42: #{downblock_forward.5} parent=39 // pred_check_branch
        %648 = sbr.rel (%p646) target = $region44
      $region43: #{downblock_forward.5} parent=39 // pred_region
        %p649 = scmp.lt.s32.totalorder %s15, 1
        %s650 = scalar_select %p649, %s15, 1
        %s651 = smul.addr %s650, 13
        %s652 = smul.addr %s651, 8
        %s653 = scalar_lea.vmem %s3, %s652
      $region44: #{downblock_forward.5} parent=39 // pred_fallthru
        _
    $region40: #{downblock_forward.5} parent=5 // pred_fallthru
      _
  $region6: #{downblock_forward.5} parent=0 // loop_footer
    %s13 = sadd.s32 1, %s9
  $region7: #{downblock_forward.5} parent=0 // loop_footer_branch
    %8 = sbr.rel target = $region3
  $region8: #{downblock_forward.5} parent=0 // loop_exit
    _

// kernel: downblock_forward.4
$region0: #{downblock_forward.4}
  #allocation0 [shape = 'u32[]', space=smem, size = 0x4, offset = 0x4, fixed_abs, tag = 'smem constant byte address 0x4 - core index']
  #allocation1 [shape = 'u32[72,128]{1,0:T(1,128)}', space=vmem, size = 0x9000, scoped, tag = 'internal scratch']
  %s0 = inlined_call_operand.vmem [shape: f32[2,104,4], index: 0, kind: input, shape index: {}]
  %s1 = inlined_call_operand.vmem [shape: f32[3,3,4,128], index: 1, kind: input, shape index: {}]
  %s2 = inlined_call_operand.vmem [shape: f32[2,80,128], index: 2, kind: output, shape index: {0}]
  %s3 = inlined_call_operand.vmem [shape: f32[2,1,128], index: 3, kind: output, shape index: {1}]
  %s4 = inlined_call_operand.vmem [shape: f32[2,1,128], index: 4, kind: output, shape index: {2}]
  %5 = xla_tuple %s2, %s3, %s4
  %s6 = sld [smem:[#allocation0]]
  $region57: #{downblock_forward.4} parent=0
    _
  %s8 = ssub.s32 1, %s6
  %s9 = scalar_select 0, %s8, %s6
  loop: start=0, step=1, limit=4
  $region2: #{downblock_forward.4} parent=0 // loop_pre_header
    _
  $region3: #{downblock_forward.4} parent=0 // loop_header
    %s11 = sphi 0, %s15
    %p12 = scmp.ge.s32.totalorder %s11, 4
    %s21 = sphi 0, %s23
    %s24 = sphi 0, %s21
    %s25 = sphi 0, %s24
    %s41 = sphi 0, %s25
    %s45 = sphi 0, %s45
    %s47 = sphi 0, %s45
    %s48 = sphi 0, %s47
    %s62 = sphi 0, %s48
    %s68 = sphi 0, %s70
    %s71 = sphi 0, %s68
    %s72 = sphi 0, %s71
    %s88 = sphi 0, %s72
    %s94 = sphi 0, %s96
    %s97 = sphi 0, %s94
    %s98 = sphi 0, %s97
    %s114 = sphi 0, %s98
    %s120 = sphi 0, %s122
    %s123 = sphi 0, %s120
    %s124 = sphi 0, %s123
    %s140 = sphi 0, %s124
  $region4: #{downblock_forward.4} parent=0 // loop_header_branch
    %14 = sbr.rel (%p12) target = $region8
  $region5: #{downblock_forward.4} parent=0 // loop_body
    %s16 = ssub.s32 %s11, 1
    %s17 = ssub.s32 %s11, 2
    %s18 = sadd.s32 %s11, 1
    %s19 = ssub.s32 %s11, %s18
    %p20 = scmp.eq.s32.totalorder %s19, 0
    %s22 = sadd.s32 %s21, 1
    %s23 = scalar_select %p20, %s21, %s22
    %p26 = pneg %p20
    %p27 = scmp.eq.s32.totalorder %s11, 1
    %p28 = por %p26, %p27
    %p29 = scmp.ne.s32.totalorder %s21, %s24
    %p30 = scmp.eq.s32.totalorder %s11, 0
    %p31 = por %p29, %p30
    %p32 = scmp.ne.s32.totalorder %s21, %s24
    %p33 = scmp.eq.s32.totalorder %s16, 1
    %p34 = por %p32, %p33
    %p35 = scmp.ne.s32.totalorder %s24, %s25
    %p36 = scmp.eq.s32.totalorder %s16, 0
    %p37 = por %p35, %p36
    %p38 = scmp.ne.s32.totalorder %s24, %s25
    %p39 = scmp.eq.s32.totalorder %s17, 1
    %p40 = por %p38, %p39
    %p42 = scmp.ne.s32.totalorder %s25, %s41
    %p43 = scmp.eq.s32.totalorder %s17, 0
    %p44 = por %p42, %p43
    %s46 = sadd.s32 %s45, 1
    %p49 = scmp.eq.s32.totalorder %s11, 1
    %p50 = scmp.ne.s32.totalorder %s45, %s47
    %p51 = scmp.eq.s32.totalorder %s11, 0
    %p52 = por %p50, %p51
    %p53 = scmp.ne.s32.totalorder %s45, %s47
    %p54 = scmp.eq.s32.totalorder %s16, 1
    %p55 = por %p53, %p54
    %p56 = scmp.ne.s32.totalorder %s47, %s48
    %p57 = scmp.eq.s32.totalorder %s16, 0
    %p58 = por %p56, %p57
    %p59 = scmp.ne.s32.totalorder %s47, %s48
    %p60 = scmp.eq.s32.totalorder %s17, 1
    %p61 = por %p59, %p60
    %p63 = scmp.ne.s32.totalorder %s48, %s62
    %p64 = scmp.eq.s32.totalorder %s17, 0
    %p65 = por %p63, %p64
    %s66 = ssub.s32 %s11, %s18
    %p67 = scmp.eq.s32.totalorder %s66, 0
    %s69 = sadd.s32 %s68, 1
    %s70 = scalar_select %p67, %s68, %s69
    %p73 = pneg %p67
    %p74 = scmp.eq.s32.totalorder %s11, 1
    %p75 = por %p73, %p74
    %p76 = scmp.ne.s32.totalorder %s68, %s71
    %p77 = scmp.eq.s32.totalorder %s11, 0
    %p78 = por %p76, %p77
    %p79 = scmp.ne.s32.totalorder %s68, %s71
    %p80 = scmp.eq.s32.totalorder %s16, 1
    %p81 = por %p79, %p80
    %p82 = scmp.ne.s32.totalorder %s71, %s72
    %p83 = scmp.eq.s32.totalorder %s16, 0
    %p84 = por %p82, %p83
    %p85 = scmp.ne.s32.totalorder %s71, %s72
    %p86 = scmp.eq.s32.totalorder %s17, 1
    %p87 = por %p85, %p86
    %p89 = scmp.ne.s32.totalorder %s72, %s88
    %p90 = scmp.eq.s32.totalorder %s17, 0
    %p91 = por %p89, %p90
    %s92 = ssub.s32 %s11, %s18
    %p93 = scmp.eq.s32.totalorder %s92, 0
    %s95 = sadd.s32 %s94, 1
    %s96 = scalar_select %p93, %s94, %s95
    %p99 = pneg %p93
    %p100 = scmp.eq.s32.totalorder %s11, 1
    %p101 = por %p99, %p100
    %p102 = scmp.ne.s32.totalorder %s94, %s97
    %p103 = scmp.eq.s32.totalorder %s11, 0
    %p104 = por %p102, %p103
    %p105 = scmp.ne.s32.totalorder %s94, %s97
    %p106 = scmp.eq.s32.totalorder %s16, 1
    %p107 = por %p105, %p106
    %p108 = scmp.ne.s32.totalorder %s97, %s98
    %p109 = scmp.eq.s32.totalorder %s16, 0
    %p110 = por %p108, %p109
    %p111 = scmp.ne.s32.totalorder %s97, %s98
    %p112 = scmp.eq.s32.totalorder %s17, 1
    %p113 = por %p111, %p112
    %p115 = scmp.ne.s32.totalorder %s98, %s114
    %p116 = scmp.eq.s32.totalorder %s17, 0
    %p117 = por %p115, %p116
    %s118 = ssub.s32 %s11, %s18
    %p119 = scmp.eq.s32.totalorder %s118, 0
    %s121 = sadd.s32 %s120, 1
    %s122 = scalar_select %p119, %s120, %s121
    %p125 = pneg %p119
    %p126 = scmp.eq.s32.totalorder %s11, 1
    %p127 = por %p125, %p126
    %p128 = scmp.ne.s32.totalorder %s120, %s123
    %p129 = scmp.eq.s32.totalorder %s11, 0
    %p130 = por %p128, %p129
    %p131 = scmp.ne.s32.totalorder %s120, %s123
    %p132 = scmp.eq.s32.totalorder %s16, 1
    %p133 = por %p131, %p132
    %p134 = scmp.ne.s32.totalorder %s123, %s124
    %p135 = scmp.eq.s32.totalorder %s16, 0
    %p136 = por %p134, %p135
    %p137 = scmp.ne.s32.totalorder %s123, %s124
    %p138 = scmp.eq.s32.totalorder %s17, 1
    %p139 = por %p137, %p138
    %p141 = scmp.ne.s32.totalorder %s124, %s140
    %p142 = scmp.eq.s32.totalorder %s17, 0
    %p143 = por %p141, %p142
    %p144 = scmp.le.s32.totalorder 1, %s11
    %p145 = scmp.lt.s32.totalorder %s11, 3
    %p146 = pnand %p144, %p145
    %p147 = pneg %p146
    // Predicated region
    $region9: #{downblock_forward.4} parent=5 // pred_check
      _
    $region10: #{downblock_forward.4} parent=5 // pred_check_branch
      %149 = sbr.rel (%p146) target = $region12
    $region11: #{downblock_forward.4} parent=5 // pred_region
      %s150 = ssub.s32 %s11, 1
      // Predicated region
      $region13: #{downblock_forward.4} parent=11 // pred_check
        %p151 = pneg %p58
      $region14: #{downblock_forward.4} parent=11 // pred_check_branch
        %153 = sbr.rel (%p151) target = $region16
      $region15: #{downblock_forward.4} parent=11 // pred_region
        _
      $region16: #{downblock_forward.4} parent=11 // pred_fallthru
        _
    $region12: #{downblock_forward.4} parent=5 // pred_fallthru
      _
    %p154 = scmp.lt.s32.totalorder %s11, 2
    // Predicated region
    $region17: #{downblock_forward.4} parent=5 // pred_check
      %p155 = pneg %p154
    $region18: #{downblock_forward.4} parent=5 // pred_check_branch
      %157 = sbr.rel (%p155) target = $region20
    $region19: #{downblock_forward.4} parent=5 // pred_region
      // Predicated region
      $region21: #{downblock_forward.4} parent=19 // pred_check
        %p158 = pneg %p31
      $region22: #{downblock_forward.4} parent=19 // pred_check_branch
        %160 = sbr.rel (%p158) target = $region24
      $region23: #{downblock_forward.4} parent=19 // pred_region
        %p161 = scmp.lt.s32.totalorder %s11, 1
        %s162 = scalar_select %p161, %s11, 1
        %s163 = smul.addr %s162, 13
        %s164 = smul.addr %s163, 8
        %s165 = scalar_lea.vmem %s0, %s164
      $region24: #{downblock_forward.4} parent=19 // pred_fallthru
        _
    $region20: #{downblock_forward.4} parent=5 // pred_fallthru
      _
    %p166 = scmp.le.s32.totalorder 1, %s11
    %p167 = scmp.lt.s32.totalorder %s11, 3
    %p168 = pnand %p166, %p167
    %p169 = pneg %p168
    // Predicated region
    $region25: #{downblock_forward.4} parent=5 // pred_check
      _
    $region26: #{downblock_forward.4} parent=5 // pred_check_branch
      %171 = sbr.rel (%p168) target = $region28
    $region27: #{downblock_forward.4} parent=5 // pred_region
      %s172 = ssub.s32 %s11, 1
      %p173 = scmp.lt.s32.totalorder %s16, 1
      %s174 = scalar_select %p173, %s16, 1
      %s175 = smul.addr %s174, 13
      %s176 = smul.addr %s175, 8
      %s177 = scalar_lea.vmem %s0, %s176
      %p178 = pneg %p37
      %p179 = pneg %p34
      %p180 = pneg %p58
      %p181 = pneg %p55
      %p182 = pneg %p84
      %p183 = pneg %p81
      %p184 = scmp.lt.s32.totalorder %s16, 1
      %s185 = scalar_select %p184, %s16, 1
      %s186 = smul.addr %s185, 10
      %s187 = smul.addr %s186, 8
      %s188 = scalar_lea.vmem %s2, %s187
      %p189 = pneg %p110
      %p190 = pneg %p107
      %p191 = scmp.lt.s32.totalorder %s16, 1
      %s192 = scalar_select %p191, %s16, 1
      %s193 = scalar_lea.vmem %s3, %s192
      %p194 = pneg %p136
      %p195 = pneg %p133
      %p196 = scmp.lt.s32.totalorder %s16, 1
      %s197 = scalar_select %p196, %s16, 1
      %s198 = scalar_lea.vmem %s4, %s197
      %p199 = scmp.lt.s32.totalorder %s16, 1
      %s200 = scalar_select %p199, %s16, 1
      %s201 = smul.addr %s200, 13
      %s202 = smul.addr %s201, 8
      %s203 = scalar_lea.vmem %s0, %s202
      %p204 = scmp.lt.s32.totalorder %s16, 1
      %s205 = scalar_select %p204, %s16, 1
      %s206 = smul.addr %s205, 10
      %s207 = smul.addr %s206, 8
      %s208 = scalar_lea.vmem %s2, %s207
      %p209 = scmp.lt.s32.totalorder %s16, 1
      %s210 = scalar_select %p209, %s16, 1
      %s211 = scalar_lea.vmem %s3, %s210
      %p212 = scmp.lt.s32.totalorder %s16, 1
      %s213 = scalar_select %p212, %s16, 1
      %s214 = scalar_lea.vmem %s4, %s213
      %v215 = vld [vmem:[%s203] sm:$0xff]
      %v216 = vld [vmem:[%s203 + $0x8] sm:$0xff]
      %v217 = vld [vmem:[%s203 + $0x10] sm:$0xff]
      %v218 = vld [vmem:[%s203 + $0x18] sm:$0xff]
      %v219 = vld [vmem:[%s203 + $0x20] sm:$0xff]
      %v220 = vld [vmem:[%s203 + $0x28] sm:$0xff]
      %v221 = vld [vmem:[%s203 + $0x30] sm:$0xff]
      %v222 = vld [vmem:[%s203 + $0x38] sm:$0xff]
      %v223 = vld [vmem:[%s203 + $0x40] sm:$0xff]
      %v224 = vld [vmem:[%s203 + $0x48] sm:$0xff]
      %v225 = vld [vmem:[%s1] sm:$0xf]
      %v226 = vld [vmem:[%s203 + $0x1] sm:$0xff]
      %v227 = vld [vmem:[%s203 + $0x9] sm:$0xff]
      %v228 = vld [vmem:[%s203 + $0x11] sm:$0xff]
      %v229 = vld [vmem:[%s203 + $0x19] sm:$0xff]
      %v230 = vld [vmem:[%s203 + $0x21] sm:$0xff]
      %v231 = vld [vmem:[%s203 + $0x29] sm:$0xff]
      %v232 = vld [vmem:[%s203 + $0x31] sm:$0xff]
      %v233 = vld [vmem:[%s203 + $0x39] sm:$0xff]
      %v234 = vld [vmem:[%s203 + $0x41] sm:$0xff]
      %v235 = vld [vmem:[%s203 + $0x49] sm:$0xff]
      %s236 = scalar_lea.vmem %s1, 4
      %v237 = vld [vmem:[%s236] sm:$0xf]
      %vm238 = vcmask 31744
      %v240 = vsel %vm238, %v226, 0
      %v243 = vsel %vm238, %v227, 0
      %v246 = vsel %vm238, %v228, 0
      %v249 = vsel %vm238, %v229, 0
      %v252 = vsel %vm238, %v230, 0
      %v255 = vsel %vm238, %v231, 0
      %v258 = vsel %vm238, %v232, 0
      %v261 = vsel %vm238, %v233, 0
      %v264 = vsel %vm238, %v234, 0
      %v267 = vsel %vm238, %v235, 0
      %vm269 = vcmask 1043456
      %v271 = vsel %vm269, %v237, 0
      %273 = vmatpush.msra.mxu0 0.0
      %274 = vmatpush.msra.mxu0 0.0
      %275 = vmatpush.msra.mxu0 0.0
      %276 = vmatpush.msra.mxu0 0.0
      %277 = vmatpush.msra.mxu0 0.0
      %278 = vmatpush.msra.mxu0 0.0
      %279 = vmatpush.msra.mxu0 0.0
      %280 = vmatpush.msra.mxu0 0.0
      %281 = vmatpush.msra.mxu0 0.0
      %282 = vmatpush.msra.mxu0 0.0
      %283 = vmatpush.msra.mxu0 0.0
      %284 = vmatpush.msra.mxu0 0.0
      %285 = vmatpush.msra.mxu0 0.0
      %286 = vmatpush.msra.mxu0 0.0
      %287 = vmatpush.msra.mxu0 0.0
      %288 = vmatpush.msra.mxu0 %v271
      %289 = vmatmul.f32.gmra.mxu0 %v240
      %v290 = vpop.f32.mrf.mxu0
      %v291 = vadd.f32 0.0, %v290
      %292 = vmatmul.f32.gmra.mxu0 %v243
      %v293 = vpop.f32.mrf.mxu0
      %v294 = vadd.f32 0.0, %v293
      %295 = vmatmul.f32.gmra.mxu0 %v246
      %v296 = vpop.f32.mrf.mxu0
      %v297 = vadd.f32 0.0, %v296
      %298 = vmatmul.f32.gmra.mxu0 %v249
      %v299 = vpop.f32.mrf.mxu0
      %v300 = vadd.f32 0.0, %v299
      %301 = vmatmul.f32.gmra.mxu0 %v252
      %v302 = vpop.f32.mrf.mxu0
      %v303 = vadd.f32 0.0, %v302
      %304 = vmatmul.f32.gmra.mxu0 %v255
      %v305 = vpop.f32.mrf.mxu0
      %v306 = vadd.f32 0.0, %v305
      %307 = vmatmul.f32.gmra.mxu0 %v258
      %v308 = vpop.f32.mrf.mxu0
      %v309 = vadd.f32 0.0, %v308
      %310 = vmatmul.f32.gmra.mxu0 %v261
      %v311 = vpop.f32.mrf.mxu0
      %v312 = vadd.f32 0.0, %v311
      %313 = vmatmul.f32.gmra.mxu0 %v264
      %v314 = vpop.f32.mrf.mxu0
      %v315 = vadd.f32 0.0, %v314
      %316 = vmatmul.f32.gmra.mxu0 %v267
      %v317 = vpop.f32.mrf.mxu0
      %v318 = vadd.f32 0.0, %v317
      %319 = vdwg.mxu0
      %v321 = vsel %vm238, %v215, 0
      %v324 = vsel %vm238, %v216, 0
      %v327 = vsel %vm238, %v217, 0
      %v330 = vsel %vm238, %v218, 0
      %v333 = vsel %vm238, %v219, 0
      %v336 = vsel %vm238, %v220, 0
      %v339 = vsel %vm238, %v221, 0
      %v342 = vsel %vm238, %v222, 0
      %v345 = vsel %vm238, %v223, 0
      %v348 = vsel %vm238, %v224, 0
      %v351 = vsel %vm269, %v225, 0
      %353 = vmatpush.msra.mxu0 0.0
      %354 = vmatpush.msra.mxu0 0.0
      %355 = vmatpush.msra.mxu0 0.0
      %356 = vmatpush.msra.mxu0 0.0
      %357 = vmatpush.msra.mxu0 0.0
      %358 = vmatpush.msra.mxu0 0.0
      %359 = vmatpush.msra.mxu0 0.0
      %360 = vmatpush.msra.mxu0 0.0
      %361 = vmatpush.msra.mxu0 0.0
      %362 = vmatpush.msra.mxu0 0.0
      %363 = vmatpush.msra.mxu0 0.0
      %364 = vmatpush.msra.mxu0 0.0
      %365 = vmatpush.msra.mxu0 0.0
      %366 = vmatpush.msra.mxu0 0.0
      %367 = vmatpush.msra.mxu0 0.0
      %368 = vmatpush.msra.mxu0 %v351
      %369 = vmatmul.f32.gmra.mxu0 %v321
      %v370 = vpop.f32.mrf.mxu0
      %v371 = vadd.f32 %v291, %v370
      %372 = vmatmul.f32.gmra.mxu0 %v324
      %v373 = vpop.f32.mrf.mxu0
      %v374 = vadd.f32 %v294, %v373
      %375 = vmatmul.f32.gmra.mxu0 %v327
      %v376 = vpop.f32.mrf.mxu0
      %v377 = vadd.f32 %v297, %v376
      %378 = vmatmul.f32.gmra.mxu0 %v330
      %v379 = vpop.f32.mrf.mxu0
      %v380 = vadd.f32 %v300, %v379
      %381 = vmatmul.f32.gmra.mxu0 %v333
      %v382 = vpop.f32.mrf.mxu0
      %v383 = vadd.f32 %v303, %v382
      %384 = vmatmul.f32.gmra.mxu0 %v336
      %v385 = vpop.f32.mrf.mxu0
      %v386 = vadd.f32 %v306, %v385
      %387 = vmatmul.f32.gmra.mxu0 %v339
      %v388 = vpop.f32.mrf.mxu0
      %v389 = vadd.f32 %v309, %v388
      %390 = vmatmul.f32.gmra.mxu0 %v342
      %v391 = vpop.f32.mrf.mxu0
      %v392 = vadd.f32 %v312, %v391
      %393 = vmatmul.f32.gmra.mxu0 %v345
      %v394 = vpop.f32.mrf.mxu0
      %v395 = vadd.f32 %v315, %v394
      %396 = vmatmul.f32.gmra.mxu0 %v348
      %v397 = vpop.f32.mrf.mxu0
      %v398 = vadd.f32 %v318, %v397
      %399 = vdwg.mxu0
      %v400 = vld [vmem:[%s203 + $0x2] sm:$0xff]
      %v401 = vld [vmem:[%s203 + $0xa] sm:$0xff]
      %v402 = vld [vmem:[%s203 + $0x12] sm:$0xff]
      %v403 = vld [vmem:[%s203 + $0x1a] sm:$0xff]
      %v404 = vld [vmem:[%s203 + $0x22] sm:$0xff]
      %v405 = vld [vmem:[%s203 + $0x2a] sm:$0xff]
      %v406 = vld [vmem:[%s203 + $0x32] sm:$0xff]
      %v407 = vld [vmem:[%s203 + $0x3a] sm:$0xff]
      %v408 = vld [vmem:[%s203 + $0x42] sm:$0xff]
      %v409 = vld [vmem:[%s203 + $0x4a] sm:$0xff]
      %s410 = scalar_lea.vmem %s1, 8
      %v411 = vld [vmem:[%s410] sm:$0xf]
      %v413 = vsel %vm238, %v400, 0
      %v416 = vsel %vm238, %v401, 0
      %v419 = vsel %vm238, %v402, 0
      %v422 = vsel %vm238, %v403, 0
      %v425 = vsel %vm238, %v404, 0
      %v428 = vsel %vm238, %v405, 0
      %v431 = vsel %vm238, %v406, 0
      %v434 = vsel %vm238, %v407, 0
      %v437 = vsel %vm238, %v408, 0
      %v440 = vsel %vm238, %v409, 0
      %v443 = vsel %vm269, %v411, 0
      %445 = vmatpush.msra.mxu0 0.0
      %446 = vmatpush.msra.mxu0 0.0
      %447 = vmatpush.msra.mxu0 0.0
      %448 = vmatpush.msra.mxu0 0.0
      %449 = vmatpush.msra.mxu0 0.0
      %450 = vmatpush.msra.mxu0 0.0
      %451 = vmatpush.msra.mxu0 0.0
      %452 = vmatpush.msra.mxu0 0.0
      %453 = vmatpush.msra.mxu0 0.0
      %454 = vmatpush.msra.mxu0 0.0
      %455 = vmatpush.msra.mxu0 0.0
      %456 = vmatpush.msra.mxu0 0.0
      %457 = vmatpush.msra.mxu0 0.0
      %458 = vmatpush.msra.mxu0 0.0
      %459 = vmatpush.msra.mxu0 0.0
      %460 = vmatpush.msra.mxu0 %v443
      %461 = vmatmul.f32.gmra.mxu0 %v413
      %v462 = vpop.f32.mrf.mxu0
      %v463 = vadd.f32 0.0, %v462
      %464 = vmatmul.f32.gmra.mxu0 %v416
      %v465 = vpop.f32.mrf.mxu0
      %v466 = vadd.f32 0.0, %v465
      %467 = vmatmul.f32.gmra.mxu0 %v419
      %v468 = vpop.f32.mrf.mxu0
      %v469 = vadd.f32 0.0, %v468
      %470 = vmatmul.f32.gmra.mxu0 %v422
      %v471 = vpop.f32.mrf.mxu0
      %v472 = vadd.f32 0.0, %v471
      %473 = vmatmul.f32.gmra.mxu0 %v425
      %v474 = vpop.f32.mrf.mxu0
      %v475 = vadd.f32 0.0, %v474
      %476 = vmatmul.f32.gmra.mxu0 %v428
      %v477 = vpop.f32.mrf.mxu0
      %v478 = vadd.f32 0.0, %v477
      %479 = vmatmul.f32.gmra.mxu0 %v431
      %v480 = vpop.f32.mrf.mxu0
      %v481 = vadd.f32 0.0, %v480
      %482 = vmatmul.f32.gmra.mxu0 %v434
      %v483 = vpop.f32.mrf.mxu0
      %v484 = vadd.f32 0.0, %v483
      %485 = vmatmul.f32.gmra.mxu0 %v437
      %v486 = vpop.f32.mrf.mxu0
      %v487 = vadd.f32 0.0, %v486
      %488 = vmatmul.f32.gmra.mxu0 %v440
      %v489 = vpop.f32.mrf.mxu0
      %v490 = vadd.f32 0.0, %v489
      %491 = vdwg.mxu0
      %v492 = vadd.f32 %v371, %v463
      %v493 = vadd.f32 %v374, %v466
      %v494 = vadd.f32 %v377, %v469
      %v495 = vadd.f32 %v380, %v472
      %v496 = vadd.f32 %v383, %v475
      %v497 = vadd.f32 %v386, %v478
      %v498 = vadd.f32 %v389, %v481
      %v499 = vadd.f32 %v392, %v484
      %v500 = vadd.f32 %v395, %v487
      %v501 = vadd.f32 %v398, %v490
      %v502 = vld [vmem:[%s203 + $0xa] sm:$0xff]
      %v503 = vld [vmem:[%s203 + $0x12] sm:$0xff]
      %v504 = vld [vmem:[%s203 + $0x1a] sm:$0xff]
      %v505 = vld [vmem:[%s203 + $0x22] sm:$0xff]
      %v506 = vld [vmem:[%s203 + $0x2a] sm:$0xff]
      %v507 = vld [vmem:[%s203 + $0x32] sm:$0xff]
      %v508 = vld [vmem:[%s203 + $0x3a] sm:$0xff]
      %v509 = vld [vmem:[%s203 + $0x42] sm:$0xff]
      %v510 = vld [vmem:[%s203 + $0x4a] sm:$0xff]
      %v511 = vld [vmem:[%s203 + $0x52] sm:$0xff]
      %s512 = scalar_lea.vmem %s1, 12
      %v513 = vld [vmem:[%s512] sm:$0xf]
      %v515 = vsel %vm238, %v502, 0
      %v518 = vsel %vm238, %v503, 0
      %v521 = vsel %vm238, %v504, 0
      %v524 = vsel %vm238, %v505, 0
      %v527 = vsel %vm238, %v506, 0
      %v530 = vsel %vm238, %v507, 0
      %v533 = vsel %vm238, %v508, 0
      %v536 = vsel %vm238, %v509, 0
      %v539 = vsel %vm238, %v510, 0
      %v542 = vsel %vm238, %v511, 0
      %v545 = vsel %vm269, %v513, 0
      %547 = vmatpush.msra.mxu0 0.0
      %548 = vmatpush.msra.mxu0 0.0
      %549 = vmatpush.msra.mxu0 0.0
      %550 = vmatpush.msra.mxu0 0.0
      %551 = vmatpush.msra.mxu0 0.0
      %552 = vmatpush.msra.mxu0 0.0
      %553 = vmatpush.msra.mxu0 0.0
      %554 = vmatpush.msra.mxu0 0.0
      %555 = vmatpush.msra.mxu0 0.0
      %556 = vmatpush.msra.mxu0 0.0
      %557 = vmatpush.msra.mxu0 0.0
      %558 = vmatpush.msra.mxu0 0.0
      %559 = vmatpush.msra.mxu0 0.0
      %560 = vmatpush.msra.mxu0 0.0
      %561 = vmatpush.msra.mxu0 0.0
      %562 = vmatpush.msra.mxu0 %v545
      %563 = vmatmul.f32.gmra.mxu0 %v515
      %v564 = vpop.f32.mrf.mxu0
      %v565 = vadd.f32 0.0, %v564
      %566 = vmatmul.f32.gmra.mxu0 %v518
      %v567 = vpop.f32.mrf.mxu0
      %v568 = vadd.f32 0.0, %v567
      %569 = vmatmul.f32.gmra.mxu0 %v521
      %v570 = vpop.f32.mrf.mxu0
      %v571 = vadd.f32 0.0, %v570
      %572 = vmatmul.f32.gmra.mxu0 %v524
      %v573 = vpop.f32.mrf.mxu0
      %v574 = vadd.f32 0.0, %v573
      %575 = vmatmul.f32.gmra.mxu0 %v527
      %v576 = vpop.f32.mrf.mxu0
      %v577 = vadd.f32 0.0, %v576
      %578 = vmatmul.f32.gmra.mxu0 %v530
      %v579 = vpop.f32.mrf.mxu0
      %v580 = vadd.f32 0.0, %v579
      %581 = vmatmul.f32.gmra.mxu0 %v533
      %v582 = vpop.f32.mrf.mxu0
      %v583 = vadd.f32 0.0, %v582
      %584 = vmatmul.f32.gmra.mxu0 %v536
      %v585 = vpop.f32.mrf.mxu0
      %v586 = vadd.f32 0.0, %v585
      %587 = vmatmul.f32.gmra.mxu0 %v539
      %v588 = vpop.f32.mrf.mxu0
      %v589 = vadd.f32 0.0, %v588
      %590 = vmatmul.f32.gmra.mxu0 %v542
      %v591 = vpop.f32.mrf.mxu0
      %v592 = vadd.f32 0.0, %v591
      %593 = vdwg.mxu0
      %v594 = vadd.f32 %v492, %v565
      %v595 = vadd.f32 %v493, %v568
      %v596 = vadd.f32 %v494, %v571
      %v597 = vadd.f32 %v495, %v574
      %v598 = vadd.f32 %v496, %v577
      %v599 = vadd.f32 %v497, %v580
      %v600 = vadd.f32 %v498, %v583
      %v601 = vadd.f32 %v499, %v586
      %v602 = vadd.f32 %v500, %v589
      %v603 = vadd.f32 %v501, %v592
      %v604 = vld [vmem:[%s203 + $0xb] sm:$0xff]
      %v605 = vld [vmem:[%s203 + $0x13] sm:$0xff]
      %v606 = vld [vmem:[%s203 + $0x1b] sm:$0xff]
      %v607 = vld [vmem:[%s203 + $0x23] sm:$0xff]
      %v608 = vld [vmem:[%s203 + $0x2b] sm:$0xff]
      %v609 = vld [vmem:[%s203 + $0x33] sm:$0xff]
      %v610 = vld [vmem:[%s203 + $0x3b] sm:$0xff]
      %v611 = vld [vmem:[%s203 + $0x43] sm:$0xff]
      %v612 = vld [vmem:[%s203 + $0x4b] sm:$0xff]
      %v613 = vld [vmem:[%s203 + $0x53] sm:$0xff]
      %s614 = scalar_lea.vmem %s1, 16
      %v615 = vld [vmem:[%s614] sm:$0xf]
      %v617 = vsel %vm238, %v604, 0
      %v620 = vsel %vm238, %v605, 0
      %v623 = vsel %vm238, %v606, 0
      %v626 = vsel %vm238, %v607, 0
      %v629 = vsel %vm238, %v608, 0
      %v632 = vsel %vm238, %v609, 0
      %v635 = vsel %vm238, %v610, 0
      %v638 = vsel %vm238, %v611, 0
      %v641 = vsel %vm238, %v612, 0
      %v644 = vsel %vm238, %v613, 0
      %v647 = vsel %vm269, %v615, 0
      %649 = vmatpush.msra.mxu0 0.0
      %650 = vmatpush.msra.mxu0 0.0
      %651 = vmatpush.msra.mxu0 0.0
      %652 = vmatpush.msra.mxu0 0.0
      %653 = vmatpush.msra.mxu0 0.0
      %654 = vmatpush.msra.mxu0 0.0
      %655 = vmatpush.msra.mxu0 0.0
      %656 = vmatpush.msra.mxu0 0.0
      %657 = vmatpush.msra.mxu0 0.0
      %658 = vmatpush.msra.mxu0 0.0
      %659 = vmatpush.msra.mxu0 0.0
      %660 = vmatpush.msra.mxu0 0.0
      %661 = vmatpush.msra.mxu0 0.0
      %662 = vmatpush.msra.mxu0 0.0
      %663 = vmatpush.msra.mxu0 0.0
      %664 = vmatpush.msra.mxu0 %v647
      %665 = vmatmul.f32.gmra.mxu0 %v617
      %v666 = vpop.f32.mrf.mxu0
      %v667 = vadd.f32 0.0, %v666
      %668 = vmatmul.f32.gmra.mxu0 %v620
      %v669 = vpop.f32.mrf.mxu0
      %v670 = vadd.f32 0.0, %v669
      %671 = vmatmul.f32.gmra.mxu0 %v623
      %v672 = vpop.f32.mrf.mxu0
      %v673 = vadd.f32 0.0, %v672
      %674 = vmatmul.f32.gmra.mxu0 %v626
      %v675 = vpop.f32.mrf.mxu0
      %v676 = vadd.f32 0.0, %v675
      %677 = vmatmul.f32.gmra.mxu0 %v629
      %v678 = vpop.f32.mrf.mxu0
      %v679 = vadd.f32 0.0, %v678
      %680 = vmatmul.f32.gmra.mxu0 %v632
      %v681 = vpop.f32.mrf.mxu0
      %v682 = vadd.f32 0.0, %v681
      %683 = vmatmul.f32.gmra.mxu0 %v635
      %v684 = vpop.f32.mrf.mxu0
      %v685 = vadd.f32 0.0, %v684
      %686 = vmatmul.f32.gmra.mxu0 %v638
      %v687 = vpop.f32.mrf.mxu0
      %v688 = vadd.f32 0.0, %v687
      %689 = vmatmul.f32.gmra.mxu0 %v641
      %v690 = vpop.f32.mrf.mxu0
      %v691 = vadd.f32 0.0, %v690
      %692 = vmatmul.f32.gmra.mxu0 %v644
      %v693 = vpop.f32.mrf.mxu0
      %v694 = vadd.f32 0.0, %v693
      %695 = vdwg.mxu0
      %v696 = vadd.f32 %v594, %v667
      %v697 = vadd.f32 %v595, %v670
      %v698 = vadd.f32 %v596, %v673
      %v699 = vadd.f32 %v597, %v676
      %v700 = vadd.f32 %v598, %v679
      %v701 = vadd.f32 %v599, %v682
      %v702 = vadd.f32 %v600, %v685
      %v703 = vadd.f32 %v601, %v688
      %v704 = vadd.f32 %v602, %v691
      %v705 = vadd.f32 %v603, %v694
      %v706 = vld [vmem:[%s203 + $0xc] sm:$0xff]
      %v707 = vld [vmem:[%s203 + $0x14] sm:$0xff]
      %v708 = vld [vmem:[%s203 + $0x1c] sm:$0xff]
      %v709 = vld [vmem:[%s203 + $0x24] sm:$0xff]
      %v710 = vld [vmem:[%s203 + $0x2c] sm:$0xff]
      %v711 = vld [vmem:[%s203 + $0x34] sm:$0xff]
      %v712 = vld [vmem:[%s203 + $0x3c] sm:$0xff]
      %v713 = vld [vmem:[%s203 + $0x44] sm:$0xff]
      %v714 = vld [vmem:[%s203 + $0x4c] sm:$0xff]
      %v715 = vld [vmem:[%s203 + $0x54] sm:$0xff]
      %s716 = scalar_lea.vmem %s1, 20
      %v717 = vld [vmem:[%s716] sm:$0xf]
      %v719 = vsel %vm238, %v706, 0
      %v722 = vsel %vm238, %v707, 0
      %v725 = vsel %vm238, %v708, 0
      %v728 = vsel %vm238, %v709, 0
      %v731 = vsel %vm238, %v710, 0
      %v734 = vsel %vm238, %v711, 0
      %v737 = vsel %vm238, %v712, 0
      %v740 = vsel %vm238, %v713, 0
      %v743 = vsel %vm238, %v714, 0
      %v746 = vsel %vm238, %v715, 0
      %v749 = vsel %vm269, %v717, 0
      %751 = vmatpush.msra.mxu0 0.0
      %752 = vmatpush.msra.mxu0 0.0
      %753 = vmatpush.msra.mxu0 0.0
      %754 = vmatpush.msra.mxu0 0.0
      %755 = vmatpush.msra.mxu0 0.0
      %756 = vmatpush.msra.mxu0 0.0
      %757 = vmatpush.msra.mxu0 0.0
      %758 = vmatpush.msra.mxu0 0.0
      %759 = vmatpush.msra.mxu0 0.0
      %760 = vmatpush.msra.mxu0 0.0
      %761 = vmatpush.msra.mxu0 0.0
      %762 = vmatpush.msra.mxu0 0.0
      %763 = vmatpush.msra.mxu0 0.0
      %764 = vmatpush.msra.mxu0 0.0
      %765 = vmatpush.msra.mxu0 0.0
      %766 = vmatpush.msra.mxu0 %v749
      %767 = vmatmul.f32.gmra.mxu0 %v719
      %v768 = vpop.f32.mrf.mxu0
      %v769 = vadd.f32 0.0, %v768
      %770 = vmatmul.f32.gmra.mxu0 %v722
      %v771 = vpop.f32.mrf.mxu0
      %v772 = vadd.f32 0.0, %v771
      %773 = vmatmul.f32.gmra.mxu0 %v725
      %v774 = vpop.f32.mrf.mxu0
      %v775 = vadd.f32 0.0, %v774
      %776 = vmatmul.f32.gmra.mxu0 %v728
      %v777 = vpop.f32.mrf.mxu0
      %v778 = vadd.f32 0.0, %v777
      %779 = vmatmul.f32.gmra.mxu0 %v731
      %v780 = vpop.f32.mrf.mxu0
      %v781 = vadd.f32 0.0, %v780
      %782 = vmatmul.f32.gmra.mxu0 %v734
      %v783 = vpop.f32.mrf.mxu0
      %v784 = vadd.f32 0.0, %v783
      %785 = vmatmul.f32.gmra.mxu0 %v737
      %v786 = vpop.f32.mrf.mxu0
      %v787 = vadd.f32 0.0, %v786
      %788 = vmatmul.f32.gmra.mxu0 %v740
      %v789 = vpop.f32.mrf.mxu0
      %v790 = vadd.f32 0.0, %v789
      %791 = vmatmul.f32.gmra.mxu0 %v743
      %v792 = vpop.f32.mrf.mxu0
      %v793 = vadd.f32 0.0, %v792
      %794 = vmatmul.f32.gmra.mxu0 %v746
      %v795 = vpop.f32.mrf.mxu0
      %v796 = vadd.f32 0.0, %v795
      %797 = vdwg.mxu0
      %v798 = vadd.f32 %v696, %v769
      %v799 = vadd.f32 %v697, %v772
      %v800 = vadd.f32 %v698, %v775
      %v801 = vadd.f32 %v699, %v778
      %v802 = vadd.f32 %v700, %v781
      %v803 = vadd.f32 %v701, %v784
      %v804 = vadd.f32 %v702, %v787
      %v805 = vadd.f32 %v703, %v790
      %v806 = vadd.f32 %v704, %v793
      %v807 = vadd.f32 %v705, %v796
      %v808 = vld [vmem:[%s203 + $0x14] sm:$0xff]
      %v809 = vld [vmem:[%s203 + $0x1c] sm:$0xff]
      %v810 = vld [vmem:[%s203 + $0x24] sm:$0xff]
      %v811 = vld [vmem:[%s203 + $0x2c] sm:$0xff]
      %v812 = vld [vmem:[%s203 + $0x34] sm:$0xff]
      %v813 = vld [vmem:[%s203 + $0x3c] sm:$0xff]
      %v814 = vld [vmem:[%s203 + $0x44] sm:$0xff]
      %v815 = vld [vmem:[%s203 + $0x4c] sm:$0xff]
      %v816 = vld [vmem:[%s203 + $0x54] sm:$0xff]
      %v817 = vld [vmem:[%s203 + $0x5c] sm:$0xff]
      %s818 = scalar_lea.vmem %s1, 24
      %v819 = vld [vmem:[%s818] sm:$0xf]
      %v821 = vsel %vm238, %v808, 0
      %v824 = vsel %vm238, %v809, 0
      %v827 = vsel %vm238, %v810, 0
      %v830 = vsel %vm238, %v811, 0
      %v833 = vsel %vm238, %v812, 0
      %v836 = vsel %vm238, %v813, 0
      %v839 = vsel %vm238, %v814, 0
      %v842 = vsel %vm238, %v815, 0
      %v845 = vsel %vm238, %v816, 0
      %v848 = vsel %vm238, %v817, 0
      %v851 = vsel %vm269, %v819, 0
      %853 = vmatpush.msra.mxu0 0.0
      %854 = vmatpush.msra.mxu0 0.0
      %855 = vmatpush.msra.mxu0 0.0
      %856 = vmatpush.msra.mxu0 0.0
      %857 = vmatpush.msra.mxu0 0.0
      %858 = vmatpush.msra.mxu0 0.0
      %859 = vmatpush.msra.mxu0 0.0
      %860 = vmatpush.msra.mxu0 0.0
      %861 = vmatpush.msra.mxu0 0.0
      %862 = vmatpush.msra.mxu0 0.0
      %863 = vmatpush.msra.mxu0 0.0
      %864 = vmatpush.msra.mxu0 0.0
      %865 = vmatpush.msra.mxu0 0.0
      %866 = vmatpush.msra.mxu0 0.0
      %867 = vmatpush.msra.mxu0 0.0
      %868 = vmatpush.msra.mxu0 %v851
      %869 = vmatmul.f32.gmra.mxu0 %v821
      %v870 = vpop.f32.mrf.mxu0
      %v871 = vadd.f32 0.0, %v870
      %872 = vmatmul.f32.gmra.mxu0 %v824
      %v873 = vpop.f32.mrf.mxu0
      %v874 = vadd.f32 0.0, %v873
      %875 = vmatmul.f32.gmra.mxu0 %v827
      %v876 = vpop.f32.mrf.mxu0
      %v877 = vadd.f32 0.0, %v876
      %878 = vmatmul.f32.gmra.mxu0 %v830
      %v879 = vpop.f32.mrf.mxu0
      %v880 = vadd.f32 0.0, %v879
      %881 = vmatmul.f32.gmra.mxu0 %v833
      %v882 = vpop.f32.mrf.mxu0
      %v883 = vadd.f32 0.0, %v882
      %884 = vmatmul.f32.gmra.mxu0 %v836
      %v885 = vpop.f32.mrf.mxu0
      %v886 = vadd.f32 0.0, %v885
      %887 = vmatmul.f32.gmra.mxu0 %v839
      %v888 = vpop.f32.mrf.mxu0
      %v889 = vadd.f32 0.0, %v888
      %890 = vmatmul.f32.gmra.mxu0 %v842
      %v891 = vpop.f32.mrf.mxu0
      %v892 = vadd.f32 0.0, %v891
      %893 = vmatmul.f32.gmra.mxu0 %v845
      %v894 = vpop.f32.mrf.mxu0
      %v895 = vadd.f32 0.0, %v894
      %896 = vmatmul.f32.gmra.mxu0 %v848
      %v897 = vpop.f32.mrf.mxu0
      %v898 = vadd.f32 0.0, %v897
      %899 = vdwg.mxu0
      %v900 = vadd.f32 %v798, %v871
      %v901 = vadd.f32 %v799, %v874
      %v902 = vadd.f32 %v800, %v877
      %v903 = vadd.f32 %v801, %v880
      %v904 = vadd.f32 %v802, %v883
      %v905 = vadd.f32 %v803, %v886
      %v906 = vadd.f32 %v804, %v889
      %v907 = vadd.f32 %v805, %v892
      %v908 = vadd.f32 %v806, %v895
      %v909 = vadd.f32 %v807, %v898
      %v910 = vld [vmem:[%s203 + $0x15] sm:$0xff]
      %v911 = vld [vmem:[%s203 + $0x1d] sm:$0xff]
      %v912 = vld [vmem:[%s203 + $0x25] sm:$0xff]
      %v913 = vld [vmem:[%s203 + $0x2d] sm:$0xff]
      %v914 = vld [vmem:[%s203 + $0x35] sm:$0xff]
      %v915 = vld [vmem:[%s203 + $0x3d] sm:$0xff]
      %v916 = vld [vmem:[%s203 + $0x45] sm:$0xff]
      %v917 = vld [vmem:[%s203 + $0x4d] sm:$0xff]
      %v918 = vld [vmem:[%s203 + $0x55] sm:$0xff]
      %v919 = vld [vmem:[%s203 + $0x5d] sm:$0xff]
      %s920 = scalar_lea.vmem %s1, 28
      %v921 = vld [vmem:[%s920] sm:$0xf]
      %v923 = vsel %vm238, %v910, 0
      %v926 = vsel %vm238, %v911, 0
      %v929 = vsel %vm238, %v912, 0
      %v932 = vsel %vm238, %v913, 0
      %v935 = vsel %vm238, %v914, 0
      %v938 = vsel %vm238, %v915, 0
      %v941 = vsel %vm238, %v916, 0
      %v944 = vsel %vm238, %v917, 0
      %v947 = vsel %vm238, %v918, 0
      %v950 = vsel %vm238, %v919, 0
      %v953 = vsel %vm269, %v921, 0
      %955 = vmatpush.msra.mxu0 0.0
      %956 = vmatpush.msra.mxu0 0.0
      %957 = vmatpush.msra.mxu0 0.0
      %958 = vmatpush.msra.mxu0 0.0
      %959 = vmatpush.msra.mxu0 0.0
      %960 = vmatpush.msra.mxu0 0.0
      %961 = vmatpush.msra.mxu0 0.0
      %962 = vmatpush.msra.mxu0 0.0
      %963 = vmatpush.msra.mxu0 0.0
      %964 = vmatpush.msra.mxu0 0.0
      %965 = vmatpush.msra.mxu0 0.0
      %966 = vmatpush.msra.mxu0 0.0
      %967 = vmatpush.msra.mxu0 0.0
      %968 = vmatpush.msra.mxu0 0.0
      %969 = vmatpush.msra.mxu0 0.0
      %970 = vmatpush.msra.mxu0 %v953
      %971 = vmatmul.f32.gmra.mxu0 %v923
      %v972 = vpop.f32.mrf.mxu0
      %v973 = vadd.f32 0.0, %v972
      %974 = vmatmul.f32.gmra.mxu0 %v926
      %v975 = vpop.f32.mrf.mxu0
      %v976 = vadd.f32 0.0, %v975
      %977 = vmatmul.f32.gmra.mxu0 %v929
      %v978 = vpop.f32.mrf.mxu0
      %v979 = vadd.f32 0.0, %v978
      %980 = vmatmul.f32.gmra.mxu0 %v932
      %v981 = vpop.f32.mrf.mxu0
      %v982 = vadd.f32 0.0, %v981
      %983 = vmatmul.f32.gmra.mxu0 %v935
      %v984 = vpop.f32.mrf.mxu0
      %v985 = vadd.f32 0.0, %v984
      %986 = vmatmul.f32.gmra.mxu0 %v938
      %v987 = vpop.f32.mrf.mxu0
      %v988 = vadd.f32 0.0, %v987
      %989 = vmatmul.f32.gmra.mxu0 %v941
      %v990 = vpop.f32.mrf.mxu0
      %v991 = vadd.f32 0.0, %v990
      %992 = vmatmul.f32.gmra.mxu0 %v944
      %v993 = vpop.f32.mrf.mxu0
      %v994 = vadd.f32 0.0, %v993
      %995 = vmatmul.f32.gmra.mxu0 %v947
      %v996 = vpop.f32.mrf.mxu0
      %v997 = vadd.f32 0.0, %v996
      %998 = vmatmul.f32.gmra.mxu0 %v950
      %v999 = vpop.f32.mrf.mxu0
      %v1000 = vadd.f32 0.0, %v999
      %1001 = vdwg.mxu0
      %v1002 = vadd.f32 %v900, %v973
      %v1003 = vadd.f32 %v901, %v976
      %v1004 = vadd.f32 %v902, %v979
      %v1005 = vadd.f32 %v903, %v982
      %v1006 = vadd.f32 %v904, %v985
      %v1007 = vadd.f32 %v905, %v988
      %v1008 = vadd.f32 %v906, %v991
      %v1009 = vadd.f32 %v907, %v994
      %v1010 = vadd.f32 %v908, %v997
      %v1011 = vadd.f32 %v909, %v1000
      %v1012 = vld [vmem:[%s203 + $0x16] sm:$0xff]
      %v1013 = vld [vmem:[%s203 + $0x1e] sm:$0xff]
      %v1014 = vld [vmem:[%s203 + $0x26] sm:$0xff]
      %v1015 = vld [vmem:[%s203 + $0x2e] sm:$0xff]
      %v1016 = vld [vmem:[%s203 + $0x36] sm:$0xff]
      %v1017 = vld [vmem:[%s203 + $0x3e] sm:$0xff]
      %v1018 = vld [vmem:[%s203 + $0x46] sm:$0xff]
      %v1019 = vld [vmem:[%s203 + $0x4e] sm:$0xff]
      %v1020 = vld [vmem:[%s203 + $0x56] sm:$0xff]
      %v1021 = vld [vmem:[%s203 + $0x5e] sm:$0xff]
      %s1022 = scalar_lea.vmem %s1, 32
      %v1023 = vld [vmem:[%s1022] sm:$0xf]
      %v1025 = vsel %vm238, %v1012, 0
      %v1028 = vsel %vm238, %v1013, 0
      %v1031 = vsel %vm238, %v1014, 0
      %v1034 = vsel %vm238, %v1015, 0
      %v1037 = vsel %vm238, %v1016, 0
      %v1040 = vsel %vm238, %v1017, 0
      %v1043 = vsel %vm238, %v1018, 0
      %v1046 = vsel %vm238, %v1019, 0
      %v1049 = vsel %vm238, %v1020, 0
      %v1052 = vsel %vm238, %v1021, 0
      %v1055 = vsel %vm269, %v1023, 0
      %1057 = vmatpush.msra.mxu0 0.0
      %1058 = vmatpush.msra.mxu0 0.0
      %1059 = vmatpush.msra.mxu0 0.0
      %1060 = vmatpush.msra.mxu0 0.0
      %1061 = vmatpush.msra.mxu0 0.0
      %1062 = vmatpush.msra.mxu0 0.0
      %1063 = vmatpush.msra.mxu0 0.0
      %1064 = vmatpush.msra.mxu0 0.0
      %1065 = vmatpush.msra.mxu0 0.0
      %1066 = vmatpush.msra.mxu0 0.0
      %1067 = vmatpush.msra.mxu0 0.0
      %1068 = vmatpush.msra.mxu0 0.0
      %1069 = vmatpush.msra.mxu0 0.0
      %1070 = vmatpush.msra.mxu0 0.0
      %1071 = vmatpush.msra.mxu0 0.0
      %1072 = vmatpush.msra.mxu0 %v1055
      %1073 = vmatmul.f32.gmra.mxu0 %v1025
      %v1074 = vpop.f32.mrf.mxu0
      %v1075 = vadd.f32 0.0, %v1074
      %1076 = vmatmul.f32.gmra.mxu0 %v1028
      %v1077 = vpop.f32.mrf.mxu0
      %v1078 = vadd.f32 0.0, %v1077
      %1079 = vmatmul.f32.gmra.mxu0 %v1031
      %v1080 = vpop.f32.mrf.mxu0
      %v1081 = vadd.f32 0.0, %v1080
      %1082 = vmatmul.f32.gmra.mxu0 %v1034
      %v1083 = vpop.f32.mrf.mxu0
      %v1084 = vadd.f32 0.0, %v1083
      %1085 = vmatmul.f32.gmra.mxu0 %v1037
      %v1086 = vpop.f32.mrf.mxu0
      %v1087 = vadd.f32 0.0, %v1086
      %1088 = vmatmul.f32.gmra.mxu0 %v1040
      %v1089 = vpop.f32.mrf.mxu0
      %v1090 = vadd.f32 0.0, %v1089
      %1091 = vmatmul.f32.gmra.mxu0 %v1043
      %v1092 = vpop.f32.mrf.mxu0
      %v1093 = vadd.f32 0.0, %v1092
      %1094 = vmatmul.f32.gmra.mxu0 %v1046
      %v1095 = vpop.f32.mrf.mxu0
      %v1096 = vadd.f32 0.0, %v1095
      %1097 = vmatmul.f32.gmra.mxu0 %v1049
      %v1098 = vpop.f32.mrf.mxu0
      %v1099 = vadd.f32 0.0, %v1098
      %1100 = vmatmul.f32.gmra.mxu0 %v1052
      %v1101 = vpop.f32.mrf.mxu0
      %v1102 = vadd.f32 0.0, %v1101
      %1103 = vdwg.mxu0
      %v1104 = vadd.f32 %v1002, %v1075
      %v1105 = vadd.f32 %v1003, %v1078
      %v1106 = vadd.f32 %v1004, %v1081
      %v1107 = vadd.f32 %v1005, %v1084
      %v1108 = vadd.f32 %v1006, %v1087
      %v1109 = vadd.f32 %v1007, %v1090
      %v1110 = vadd.f32 %v1008, %v1093
      %v1111 = vadd.f32 %v1009, %v1096
      %v1112 = vadd.f32 %v1010, %v1099
      %v1113 = vadd.f32 %v1011, %v1102
      %v1114 = vlaneseq
      %v1115 = vshrl.u32 %v1114, 7
      %v1116 = vadd.s32 %v1115, 8
      %v1117 = vadd.s32 %v1115, 16
      %v1118 = vadd.s32 %v1115, 24
      %v1119 = vadd.s32 %v1115, 32
      %v1120 = vadd.s32 %v1115, 40
      %v1121 = vadd.s32 %v1115, 48
      %v1122 = vadd.s32 %v1115, 56
      %v1123 = vadd.s32 %v1115, 64
      %v1124 = vadd.s32 %v1115, 72
      %vm1125 = vcmp.lt.s32.totalorder %v1115, 0
      %v1126 = vsub.s32 0, %v1115
      %v1127 = vsel %vm1125, %v1126, %v1115
      %v1128 = vand.u32 %v1127, 65535
      %v1129 = vshrl.u32 %v1127, 16
      %v1131 = vmul.u32 %v1128, 52429
      %v1132 = vmul.u32 %v1128, 52428
      %v1133 = vmul.u32 %v1129, 52429
      %v1134 = vmul.u32 %v1129, 52428
      %v1135 = vshll.u32 %v1132, 16
      %v1136 = vshrl.u32 %v1132, 16
      %v1137 = vshll.u32 %v1133, 16
      %v1138 = vshrl.u32 %v1133, 16
      %vm1139 = vc.u32 %v1131, %v1135
      %v1140 = vsel %vm1139, 1, 0
      %v1141 = vadd.s32 %v1131, %v1135
      %v1142 = vadd.s32 %v1134, %v1140
      %vm1143 = vc.u32 %v1141, %v1137
      %v1144 = vsel %vm1143, 1, 0
      %v1145 = vadd.s32 %v1141, %v1137
      %v1146 = vadd.s32 %v1142, %v1144
      %v1147 = vadd.s32 %v1146, %v1136
      %v1148 = vadd.s32 %v1147, %v1138
      %v1149 = vshrl.u32 %v1148, 3
      %v1150 = vmul.u32 %v1149, 10
      %v1151 = vsub.s32 %v1127, %v1150
      %v1152 = vsub.s32 0, %v1151
      %v1153 = vsel %vm1125, %v1152, %v1151
      %vm1154 = vcmp.lt.s32.totalorder %v1116, 0
      %v1155 = vsub.s32 0, %v1116
      %v1156 = vsel %vm1154, %v1155, %v1116
      %v1157 = vand.u32 %v1156, 65535
      %v1158 = vshrl.u32 %v1156, 16
      %v1160 = vmul.u32 %v1157, 52429
      %v1161 = vmul.u32 %v1157, 52428
      %v1162 = vmul.u32 %v1158, 52429
      %v1163 = vmul.u32 %v1158, 52428
      %v1164 = vshll.u32 %v1161, 16
      %v1165 = vshrl.u32 %v1161, 16
      %v1166 = vshll.u32 %v1162, 16
      %v1167 = vshrl.u32 %v1162, 16
      %vm1168 = vc.u32 %v1160, %v1164
      %v1169 = vsel %vm1168, 1, 0
      %v1170 = vadd.s32 %v1160, %v1164
      %v1171 = vadd.s32 %v1163, %v1169
      %vm1172 = vc.u32 %v1170, %v1166
      %v1173 = vsel %vm1172, 1, 0
      %v1174 = vadd.s32 %v1170, %v1166
      %v1175 = vadd.s32 %v1171, %v1173
      %v1176 = vadd.s32 %v1175, %v1165
      %v1177 = vadd.s32 %v1176, %v1167
      %v1178 = vshrl.u32 %v1177, 3
      %v1179 = vmul.u32 %v1178, 10
      %v1180 = vsub.s32 %v1156, %v1179
      %v1181 = vsub.s32 0, %v1180
      %v1182 = vsel %vm1154, %v1181, %v1180
      %vm1183 = vcmp.lt.s32.totalorder %v1117, 0
      %v1184 = vsub.s32 0, %v1117
      %v1185 = vsel %vm1183, %v1184, %v1117
      %v1186 = vand.u32 %v1185, 65535
      %v1187 = vshrl.u32 %v1185, 16
      %v1189 = vmul.u32 %v1186, 52429
      %v1190 = vmul.u32 %v1186, 52428
      %v1191 = vmul.u32 %v1187, 52429
      %v1192 = vmul.u32 %v1187, 52428
      %v1193 = vshll.u32 %v1190, 16
      %v1194 = vshrl.u32 %v1190, 16
      %v1195 = vshll.u32 %v1191, 16
      %v1196 = vshrl.u32 %v1191, 16
      %vm1197 = vc.u32 %v1189, %v1193
      %v1198 = vsel %vm1197, 1, 0
      %v1199 = vadd.s32 %v1189, %v1193
      %v1200 = vadd.s32 %v1192, %v1198
      %vm1201 = vc.u32 %v1199, %v1195
      %v1202 = vsel %vm1201, 1, 0
      %v1203 = vadd.s32 %v1199, %v1195
      %v1204 = vadd.s32 %v1200, %v1202
      %v1205 = vadd.s32 %v1204, %v1194
      %v1206 = vadd.s32 %v1205, %v1196
      %v1207 = vshrl.u32 %v1206, 3
      %v1208 = vmul.u32 %v1207, 10
      %v1209 = vsub.s32 %v1185, %v1208
      %v1210 = vsub.s32 0, %v1209
      %v1211 = vsel %vm1183, %v1210, %v1209
      %vm1212 = vcmp.lt.s32.totalorder %v1118, 0
      %v1213 = vsub.s32 0, %v1118
      %v1214 = vsel %vm1212, %v1213, %v1118
      %v1215 = vand.u32 %v1214, 65535
      %v1216 = vshrl.u32 %v1214, 16
      %v1218 = vmul.u32 %v1215, 52429
      %v1219 = vmul.u32 %v1215, 52428
      %v1220 = vmul.u32 %v1216, 52429
      %v1221 = vmul.u32 %v1216, 52428
      %v1222 = vshll.u32 %v1219, 16
      %v1223 = vshrl.u32 %v1219, 16
      %v1224 = vshll.u32 %v1220, 16
      %v1225 = vshrl.u32 %v1220, 16
      %vm1226 = vc.u32 %v1218, %v1222
      %v1227 = vsel %vm1226, 1, 0
      %v1228 = vadd.s32 %v1218, %v1222
      %v1229 = vadd.s32 %v1221, %v1227
      %vm1230 = vc.u32 %v1228, %v1224
      %v1231 = vsel %vm1230, 1, 0
      %v1232 = vadd.s32 %v1228, %v1224
      %v1233 = vadd.s32 %v1229, %v1231
      %v1234 = vadd.s32 %v1233, %v1223
      %v1235 = vadd.s32 %v1234, %v1225
      %v1236 = vshrl.u32 %v1235, 3
      %v1237 = vmul.u32 %v1236, 10
      %v1238 = vsub.s32 %v1214, %v1237
      %v1239 = vsub.s32 0, %v1238
      %v1240 = vsel %vm1212, %v1239, %v1238
      %vm1241 = vcmp.lt.s32.totalorder %v1119, 0
      %v1242 = vsub.s32 0, %v1119
      %v1243 = vsel %vm1241, %v1242, %v1119
      %v1244 = vand.u32 %v1243, 65535
      %v1245 = vshrl.u32 %v1243, 16
      %v1247 = vmul.u32 %v1244, 52429
      %v1248 = vmul.u32 %v1244, 52428
      %v1249 = vmul.u32 %v1245, 52429
      %v1250 = vmul.u32 %v1245, 52428
      %v1251 = vshll.u32 %v1248, 16
      %v1252 = vshrl.u32 %v1248, 16
      %v1253 = vshll.u32 %v1249, 16
      %v1254 = vshrl.u32 %v1249, 16
      %vm1255 = vc.u32 %v1247, %v1251
      %v1256 = vsel %vm1255, 1, 0
      %v1257 = vadd.s32 %v1247, %v1251
      %v1258 = vadd.s32 %v1250, %v1256
      %vm1259 = vc.u32 %v1257, %v1253
      %v1260 = vsel %vm1259, 1, 0
      %v1261 = vadd.s32 %v1257, %v1253
      %v1262 = vadd.s32 %v1258, %v1260
      %v1263 = vadd.s32 %v1262, %v1252
      %v1264 = vadd.s32 %v1263, %v1254
      %v1265 = vshrl.u32 %v1264, 3
      %v1266 = vmul.u32 %v1265, 10
      %v1267 = vsub.s32 %v1243, %v1266
      %v1268 = vsub.s32 0, %v1267
      %v1269 = vsel %vm1241, %v1268, %v1267
      %vm1270 = vcmp.lt.s32.totalorder %v1120, 0
      %v1271 = vsub.s32 0, %v1120
      %v1272 = vsel %vm1270, %v1271, %v1120
      %v1273 = vand.u32 %v1272, 65535
      %v1274 = vshrl.u32 %v1272, 16
      %v1276 = vmul.u32 %v1273, 52429
      %v1277 = vmul.u32 %v1273, 52428
      %v1278 = vmul.u32 %v1274, 52429
      %v1279 = vmul.u32 %v1274, 52428
      %v1280 = vshll.u32 %v1277, 16
      %v1281 = vshrl.u32 %v1277, 16
      %v1282 = vshll.u32 %v1278, 16
      %v1283 = vshrl.u32 %v1278, 16
      %vm1284 = vc.u32 %v1276, %v1280
      %v1285 = vsel %vm1284, 1, 0
      %v1286 = vadd.s32 %v1276, %v1280
      %v1287 = vadd.s32 %v1279, %v1285
      %vm1288 = vc.u32 %v1286, %v1282
      %v1289 = vsel %vm1288, 1, 0
      %v1290 = vadd.s32 %v1286, %v1282
      %v1291 = vadd.s32 %v1287, %v1289
      %v1292 = vadd.s32 %v1291, %v1281
      %v1293 = vadd.s32 %v1292, %v1283
      %v1294 = vshrl.u32 %v1293, 3
      %v1295 = vmul.u32 %v1294, 10
      %v1296 = vsub.s32 %v1272, %v1295
      %v1297 = vsub.s32 0, %v1296
      %v1298 = vsel %vm1270, %v1297, %v1296
      %vm1299 = vcmp.lt.s32.totalorder %v1121, 0
      %v1300 = vsub.s32 0, %v1121
      %v1301 = vsel %vm1299, %v1300, %v1121
      %v1302 = vand.u32 %v1301, 65535
      %v1303 = vshrl.u32 %v1301, 16
      %v1305 = vmul.u32 %v1302, 52429
      %v1306 = vmul.u32 %v1302, 52428
      %v1307 = vmul.u32 %v1303, 52429
      %v1308 = vmul.u32 %v1303, 52428
      %v1309 = vshll.u32 %v1306, 16
      %v1310 = vshrl.u32 %v1306, 16
      %v1311 = vshll.u32 %v1307, 16
      %v1312 = vshrl.u32 %v1307, 16
      %vm1313 = vc.u32 %v1305, %v1309
      %v1314 = vsel %vm1313, 1, 0
      %v1315 = vadd.s32 %v1305, %v1309
      %v1316 = vadd.s32 %v1308, %v1314
      %vm1317 = vc.u32 %v1315, %v1311
      %v1318 = vsel %vm1317, 1, 0
      %v1319 = vadd.s32 %v1315, %v1311
      %v1320 = vadd.s32 %v1316, %v1318
      %v1321 = vadd.s32 %v1320, %v1310
      %v1322 = vadd.s32 %v1321, %v1312
      %v1323 = vshrl.u32 %v1322, 3
      %v1324 = vmul.u32 %v1323, 10
      %v1325 = vsub.s32 %v1301, %v1324
      %v1326 = vsub.s32 0, %v1325
      %v1327 = vsel %vm1299, %v1326, %v1325
      %vm1328 = vcmp.lt.s32.totalorder %v1122, 0
      %v1329 = vsub.s32 0, %v1122
      %v1330 = vsel %vm1328, %v1329, %v1122
      %v1331 = vand.u32 %v1330, 65535
      %v1332 = vshrl.u32 %v1330, 16
      %v1334 = vmul.u32 %v1331, 52429
      %v1335 = vmul.u32 %v1331, 52428
      %v1336 = vmul.u32 %v1332, 52429
      %v1337 = vmul.u32 %v1332, 52428
      %v1338 = vshll.u32 %v1335, 16
      %v1339 = vshrl.u32 %v1335, 16
      %v1340 = vshll.u32 %v1336, 16
      %v1341 = vshrl.u32 %v1336, 16
      %vm1342 = vc.u32 %v1334, %v1338
      %v1343 = vsel %vm1342, 1, 0
      %v1344 = vadd.s32 %v1334, %v1338
      %v1345 = vadd.s32 %v1337, %v1343
      %vm1346 = vc.u32 %v1344, %v1340
      %v1347 = vsel %vm1346, 1, 0
      %v1348 = vadd.s32 %v1344, %v1340
      %v1349 = vadd.s32 %v1345, %v1347
      %v1350 = vadd.s32 %v1349, %v1339
      %v1351 = vadd.s32 %v1350, %v1341
      %v1352 = vshrl.u32 %v1351, 3
      %v1353 = vmul.u32 %v1352, 10
      %v1354 = vsub.s32 %v1330, %v1353
      %v1355 = vsub.s32 0, %v1354
      %v1356 = vsel %vm1328, %v1355, %v1354
      %vm1357 = vcmp.lt.s32.totalorder %v1123, 0
      %v1358 = vsub.s32 0, %v1123
      %v1359 = vsel %vm1357, %v1358, %v1123
      %v1360 = vand.u32 %v1359, 65535
      %v1361 = vshrl.u32 %v1359, 16
      %v1363 = vmul.u32 %v1360, 52429
      %v1364 = vmul.u32 %v1360, 52428
      %v1365 = vmul.u32 %v1361, 52429
      %v1366 = vmul.u32 %v1361, 52428
      %v1367 = vshll.u32 %v1364, 16
      %v1368 = vshrl.u32 %v1364, 16
      %v1369 = vshll.u32 %v1365, 16
      %v1370 = vshrl.u32 %v1365, 16
      %vm1371 = vc.u32 %v1363, %v1367
      %v1372 = vsel %vm1371, 1, 0
      %v1373 = vadd.s32 %v1363, %v1367
      %v1374 = vadd.s32 %v1366, %v1372
      %vm1375 = vc.u32 %v1373, %v1369
      %v1376 = vsel %vm1375, 1, 0
      %v1377 = vadd.s32 %v1373, %v1369
      %v1378 = vadd.s32 %v1374, %v1376
      %v1379 = vadd.s32 %v1378, %v1368
      %v1380 = vadd.s32 %v1379, %v1370
      %v1381 = vshrl.u32 %v1380, 3
      %v1382 = vmul.u32 %v1381, 10
      %v1383 = vsub.s32 %v1359, %v1382
      %v1384 = vsub.s32 0, %v1383
      %v1385 = vsel %vm1357, %v1384, %v1383
      %vm1386 = vcmp.lt.s32.totalorder %v1124, 0
      %v1387 = vsub.s32 0, %v1124
      %v1388 = vsel %vm1386, %v1387, %v1124
      %v1389 = vand.u32 %v1388, 65535
      %v1390 = vshrl.u32 %v1388, 16
      %v1392 = vmul.u32 %v1389, 52429
      %v1393 = vmul.u32 %v1389, 52428
      %v1394 = vmul.u32 %v1390, 52429
      %v1395 = vmul.u32 %v1390, 52428
      %v1396 = vshll.u32 %v1393, 16
      %v1397 = vshrl.u32 %v1393, 16
      %v1398 = vshll.u32 %v1394, 16
      %v1399 = vshrl.u32 %v1394, 16
      %vm1400 = vc.u32 %v1392, %v1396
      %v1401 = vsel %vm1400, 1, 0
      %v1402 = vadd.s32 %v1392, %v1396
      %v1403 = vadd.s32 %v1395, %v1401
      %vm1404 = vc.u32 %v1402, %v1398
      %v1405 = vsel %vm1404, 1, 0
      %v1406 = vadd.s32 %v1402, %v1398
      %v1407 = vadd.s32 %v1403, %v1405
      %v1408 = vadd.s32 %v1407, %v1397
      %v1409 = vadd.s32 %v1408, %v1399
      %v1410 = vshrl.u32 %v1409, 3
      %v1411 = vmul.u32 %v1410, 10
      %v1412 = vsub.s32 %v1388, %v1411
      %v1413 = vsub.s32 0, %v1412
      %v1414 = vsel %vm1386, %v1413, %v1412
      %vm1415 = vcmp.ne.s32.totalorder %v1153, 0
      %vm1416 = vcmp.ne.s32.totalorder %v1182, 0
      %vm1417 = vcmp.ne.s32.totalorder %v1211, 0
      %vm1418 = vcmp.ne.s32.totalorder %v1240, 0
      %vm1419 = vcmp.ne.s32.totalorder %v1269, 0
      %vm1420 = vcmp.ne.s32.totalorder %v1298, 0
      %vm1421 = vcmp.ne.s32.totalorder %v1327, 0
      %vm1422 = vcmp.ne.s32.totalorder %v1356, 0
      %vm1423 = vcmp.ne.s32.totalorder %v1385, 0
      %vm1424 = vcmp.ne.s32.totalorder %v1414, 0
      %vm1425 = vcmp.lt.s32.totalorder %v1153, 0
      %vm1426 = vcmp.lt.s32.totalorder %v1182, 0
      %vm1427 = vcmp.lt.s32.totalorder %v1211, 0
      %vm1428 = vcmp.lt.s32.totalorder %v1240, 0
      %vm1429 = vcmp.lt.s32.totalorder %v1269, 0
      %vm1430 = vcmp.lt.s32.totalorder %v1298, 0
      %vm1431 = vcmp.lt.s32.totalorder %v1327, 0
      %vm1432 = vcmp.lt.s32.totalorder %v1356, 0
      %vm1433 = vcmp.lt.s32.totalorder %v1385, 0
      %vm1434 = vcmp.lt.s32.totalorder %v1414, 0
      %vm1435 = vmand %vm1425, %vm1415
      %vm1436 = vmand %vm1426, %vm1416
      %vm1437 = vmand %vm1427, %vm1417
      %vm1438 = vmand %vm1428, %vm1418
      %vm1439 = vmand %vm1429, %vm1419
      %vm1440 = vmand %vm1430, %vm1420
      %vm1441 = vmand %vm1431, %vm1421
      %vm1442 = vmand %vm1432, %vm1422
      %vm1443 = vmand %vm1433, %vm1423
      %vm1444 = vmand %vm1434, %vm1424
      %v1445 = vadd.s32 %v1153, 10
      %v1446 = vadd.s32 %v1182, 10
      %v1447 = vadd.s32 %v1211, 10
      %v1448 = vadd.s32 %v1240, 10
      %v1449 = vadd.s32 %v1269, 10
      %v1450 = vadd.s32 %v1298, 10
      %v1451 = vadd.s32 %v1327, 10
      %v1452 = vadd.s32 %v1356, 10
      %v1453 = vadd.s32 %v1385, 10
      %v1454 = vadd.s32 %v1414, 10
      %v1455 = vsel %vm1435, %v1445, %v1153
      %v1456 = vsel %vm1436, %v1446, %v1182
      %v1457 = vsel %vm1437, %v1447, %v1211
      %v1458 = vsel %vm1438, %v1448, %v1240
      %v1459 = vsel %vm1439, %v1449, %v1269
      %v1460 = vsel %vm1440, %v1450, %v1298
      %v1461 = vsel %vm1441, %v1451, %v1327
      %v1462 = vsel %vm1442, %v1452, %v1356
      %v1463 = vsel %vm1443, %v1453, %v1385
      %v1464 = vsel %vm1444, %v1454, %v1414
      %vm1465 = vcmp.lt.s32.totalorder %v1455, 8
      %vm1466 = vcmp.lt.s32.totalorder %v1456, 8
      %vm1467 = vcmp.lt.s32.totalorder %v1457, 8
      %vm1468 = vcmp.lt.s32.totalorder %v1458, 8
      %vm1469 = vcmp.lt.s32.totalorder %v1459, 8
      %vm1470 = vcmp.lt.s32.totalorder %v1460, 8
      %vm1471 = vcmp.lt.s32.totalorder %v1461, 8
      %vm1472 = vcmp.lt.s32.totalorder %v1462, 8
      %vm1473 = vcmp.lt.s32.totalorder %v1463, 8
      %vm1474 = vcmp.lt.s32.totalorder %v1464, 8
      %v1475 = vsel %vm1465, 1, 0
      %v1476 = vsel %vm1466, 1, 0
      %v1477 = vsel %vm1467, 1, 0
      %v1478 = vsel %vm1468, 1, 0
      %v1479 = vsel %vm1469, 1, 0
      %v1480 = vsel %vm1470, 1, 0
      %v1481 = vsel %vm1471, 1, 0
      %v1482 = vsel %vm1472, 1, 0
      %v1483 = vsel %vm1473, 1, 0
      %v1484 = vsel %vm1474, 1, 0
      %vm1485 = vcmp.eq.s32.totalorder %v1475, 1
      %vm1486 = vcmp.eq.s32.totalorder %v1476, 1
      %vm1487 = vcmp.eq.s32.totalorder %v1477, 1
      %vm1488 = vcmp.eq.s32.totalorder %v1478, 1
      %vm1489 = vcmp.eq.s32.totalorder %v1479, 1
      %vm1490 = vcmp.eq.s32.totalorder %v1480, 1
      %vm1491 = vcmp.eq.s32.totalorder %v1481, 1
      %vm1492 = vcmp.eq.s32.totalorder %v1482, 1
      %vm1493 = vcmp.eq.s32.totalorder %v1483, 1
      %vm1494 = vcmp.eq.s32.totalorder %v1484, 1
      %v1495 = vsel %vm1485, %v1104, 0.0
      %v1496 = vsel %vm1486, %v1105, 0.0
      %v1497 = vsel %vm1487, %v1106, 0.0
      %v1498 = vsel %vm1488, %v1107, 0.0
      %v1499 = vsel %vm1489, %v1108, 0.0
      %v1500 = vsel %vm1490, %v1109, 0.0
      %v1501 = vsel %vm1491, %v1110, 0.0
      %v1502 = vsel %vm1492, %v1111, 0.0
      %v1503 = vsel %vm1493, %v1112, 0.0
      %v1504 = vsel %vm1494, %v1113, 0.0
      %1505 = vst [vmem:[%s208] sm:$0xff] %v1104
      %1506 = vst [vmem:[%s208 + $0x8] sm:$0xff] %v1105
      %1507 = vst [vmem:[%s208 + $0x10] sm:$0xff] %v1106
      %1508 = vst [vmem:[%s208 + $0x18] sm:$0xff] %v1107
      %1509 = vst [vmem:[%s208 + $0x20] sm:$0xff] %v1108
      %1510 = vst [vmem:[%s208 + $0x28] sm:$0xff] %v1109
      %1511 = vst [vmem:[%s208 + $0x30] sm:$0xff] %v1110
      %1512 = vst [vmem:[%s208 + $0x38] sm:$0xff] %v1111
      %1513 = vst [vmem:[%s208 + $0x40] sm:$0xff] %v1112
      %1514 = vst [vmem:[%s208 + $0x48] sm:$0xff] %v1113
      %v1515 = vadd.f32 %v1495, %v1496
      %v1516 = vadd.f32 %v1515, %v1497
      %v1517 = vadd.f32 %v1516, %v1498
      %v1518 = vadd.f32 %v1517, %v1499
      %v1519 = vadd.f32 %v1518, %v1500
      %v1520 = vadd.f32 %v1519, %v1501
      %v1521 = vadd.f32 %v1520, %v1502
      %v1522 = vadd.f32 %v1521, %v1503
      %v1523 = vadd.f32 %v1522, %v1504
      %v1524 = vrot.slane %v1523, 4
      %v1525 = vadd.f32 %v1523, %v1524
      %v1526 = vrot.slane %v1525, 2
      %v1527 = vadd.f32 %v1525, %v1526
      %v1528 = vrot.slane %v1527, 1
      %v1529 = vadd.f32 %v1527, %v1528
      %1530 = vst [vmem:[%s211] sm:$0x1] %v1529
      %v1531 = vmul.f32 %v1495, %v1495
      %v1532 = vmul.f32 %v1496, %v1496
      %v1533 = vmul.f32 %v1497, %v1497
      %v1534 = vmul.f32 %v1498, %v1498
      %v1535 = vmul.f32 %v1499, %v1499
      %v1536 = vmul.f32 %v1500, %v1500
      %v1537 = vmul.f32 %v1501, %v1501
      %v1538 = vmul.f32 %v1502, %v1502
      %v1539 = vmul.f32 %v1503, %v1503
      %v1540 = vmul.f32 %v1504, %v1504
      %v1541 = vadd.f32 %v1531, %v1532
      %v1542 = vadd.f32 %v1541, %v1533
      %v1543 = vadd.f32 %v1542, %v1534
      %v1544 = vadd.f32 %v1543, %v1535
      %v1545 = vadd.f32 %v1544, %v1536
      %v1546 = vadd.f32 %v1545, %v1537
      %v1547 = vadd.f32 %v1546, %v1538
      %v1548 = vadd.f32 %v1547, %v1539
      %v1549 = vadd.f32 %v1548, %v1540
      %v1550 = vrot.slane %v1549, 4
      %v1551 = vadd.f32 %v1549, %v1550
      %v1552 = vrot.slane %v1551, 2
      %v1553 = vadd.f32 %v1551, %v1552
      %v1554 = vrot.slane %v1553, 1
      %v1555 = vadd.f32 %v1553, %v1554
      %1556 = vst [vmem:[%s214] sm:$0x1] %v1555
      %p1557 = scmp.lt.s32.totalorder %s16, 1
      %s1558 = scalar_select %p1557, %s16, 1
      %s1559 = smul.addr %s1558, 10
      %s1560 = smul.addr %s1559, 8
      %s1561 = scalar_lea.vmem %s2, %s1560
      %p1562 = scmp.lt.s32.totalorder %s16, 1
      %s1563 = scalar_select %p1562, %s16, 1
      %s1564 = scalar_lea.vmem %s3, %s1563
      %p1565 = scmp.lt.s32.totalorder %s16, 1
      %s1566 = scalar_select %p1565, %s16, 1
      %s1567 = scalar_lea.vmem %s4, %s1566
      // Predicated region
      $region29: #{downblock_forward.4} parent=27 // pred_check
        %p1568 = pneg %p81
      $region30: #{downblock_forward.4} parent=27 // pred_check_branch
        %1570 = sbr.rel (%p1568) target = $region32
      $region31: #{downblock_forward.4} parent=27 // pred_region
        _
      $region32: #{downblock_forward.4} parent=27 // pred_fallthru
        _
      // Predicated region
      $region33: #{downblock_forward.4} parent=27 // pred_check
        %p1571 = pneg %p107
      $region34: #{downblock_forward.4} parent=27 // pred_check_branch
        %1573 = sbr.rel (%p1571) target = $region36
      $region35: #{downblock_forward.4} parent=27 // pred_region
        _
      $region36: #{downblock_forward.4} parent=27 // pred_fallthru
        _
      // Predicated region
      $region37: #{downblock_forward.4} parent=27 // pred_check
        %p1574 = pneg %p133
      $region38: #{downblock_forward.4} parent=27 // pred_check_branch
        %1576 = sbr.rel (%p1574) target = $region40
      $region39: #{downblock_forward.4} parent=27 // pred_region
        _
      $region40: #{downblock_forward.4} parent=27 // pred_fallthru
        _
    $region28: #{downblock_forward.4} parent=5 // pred_fallthru
      _
    %p1577 = scmp.le.s32.totalorder 2, %s11
    // Predicated region
    $region41: #{downblock_forward.4} parent=5 // pred_check
      %p1578 = pneg %p1577
    $region42: #{downblock_forward.4} parent=5 // pred_check_branch
      %1580 = sbr.rel (%p1578) target = $region44
    $region43: #{downblock_forward.4} parent=5 // pred_region
      %s1581 = ssub.s32 %s11, 2
      // Predicated region
      $region45: #{downblock_forward.4} parent=43 // pred_check
        %p1582 = pneg %p87
      $region46: #{downblock_forward.4} parent=43 // pred_check_branch
        %1584 = sbr.rel (%p1582) target = $region48
      $region47: #{downblock_forward.4} parent=43 // pred_region
        %p1585 = scmp.lt.s32.totalorder %s17, 1
        %s1586 = scalar_select %p1585, %s17, 1
        %s1587 = smul.addr %s1586, 10
        %s1588 = smul.addr %s1587, 8
        %s1589 = scalar_lea.vmem %s2, %s1588
      $region48: #{downblock_forward.4} parent=43 // pred_fallthru
        _
      // Predicated region
      $region49: #{downblock_forward.4} parent=43 // pred_check
        %p1590 = pneg %p113
      $region50: #{downblock_forward.4} parent=43 // pred_check_branch
        %1592 = sbr.rel (%p1590) target = $region52
      $region51: #{downblock_forward.4} parent=43 // pred_region
        %p1593 = scmp.lt.s32.totalorder %s17, 1
        %s1594 = scalar_select %p1593, %s17, 1
        %s1595 = scalar_lea.vmem %s3, %s1594
      $region52: #{downblock_forward.4} parent=43 // pred_fallthru
        _
      // Predicated region
      $region53: #{downblock_forward.4} parent=43 // pred_check
        %p1596 = pneg %p139
      $region54: #{downblock_forward.4} parent=43 // pred_check_branch
        %1598 = sbr.rel (%p1596) target = $region56
      $region55: #{downblock_forward.4} parent=43 // pred_region
        %p1599 = scmp.lt.s32.totalorder %s17, 1
        %s1600 = scalar_select %p1599, %s17, 1
        %s1601 = scalar_lea.vmem %s4, %s1600
      $region56: #{downblock_forward.4} parent=43 // pred_fallthru
        _
    $region44: #{downblock_forward.4} parent=5 // pred_fallthru
      _
  $region6: #{downblock_forward.4} parent=0 // loop_footer
    %s15 = sadd.s32 1, %s11
  $region7: #{downblock_forward.4} parent=0 // loop_footer_branch
    %10 = sbr.rel target = $region3
  $region8: #{downblock_forward.4} parent=0 // loop_exit
    _

</llo_original>
